<compile_context>
chip_gen: v7x
topology: tpu7x:2x2x1
jax: 0.10.0
libtpu: 0.0.40
codegen_flags: <defaults>
</compile_context>

<pallas_src>
import functools

import jax
import jax.numpy as jnp
from jax.experimental import pallas as pl
from jax.experimental.pallas import tpu as pltpu


def _gcnext_kernel(xk_ref, xq_ref, w1_ref, b1_ref, w2_ref, b2_ref,
                   w3_ref, b3_ref, wa_ref, ba_ref, o_ref, *, k, n_valid):
    f32, bf16 = jnp.float32, jnp.bfloat16

    x_keys = xk_ref[0]                 # (C, Np) f32, channels-first, resident over q
    x_q = xq_ref[0]                    # (C, tq) f32 query tile
    n_keys = x_keys.shape[1]
    tq = x_q.shape[1]

    # Hoisted parameter loads (weights bf16, biases f32 columns).
    w1 = w1_ref[...]; b1 = b1_ref[...]          # (W, 2C) / (W, 1)
    w2 = w2_ref[...]; b2 = b2_ref[...]          # (W, W)  / (W, 1)
    w3 = w3_ref[...]; b3 = b3_ref[...]          # (Co, W) / (Co, 1)
    wa = wa_ref[...]; ba = ba_ref[...]          # (Co, C) / (Co, 1)

    # ---------------- knn scores, (keys, queries) layout ----------------
    # bf16 MXU operands, f32 accumulation; ranking consistently uses the
    # bf16-rounded coordinates (gcnext_ref does the same).
    xk_b = x_keys.astype(bf16)                                    # (C, Np)
    xq_b = x_q.astype(bf16)                                       # (C, tq)
    xk_t = jnp.transpose(xk_b.astype(f32))                        # (Np, C)  tiny, one-time
    sq_col = jnp.sum(xk_t * xk_t, axis=1, keepdims=True)          # (Np, 1) key norms
    gram = jnp.dot(xk_t.astype(bf16), xq_b,
                   preferred_element_type=f32)                    # (Np, tq)
    # Differs from -||x_n - x_m||^2 only by a per-query constant -> same top-k.
    score = 2.0 * gram - sq_col                                   # (Np, tq) f32

    row = jax.lax.broadcasted_iota(jnp.int32, (n_keys, tq), 0)
    neg = jnp.float32(-1e30)
    if n_valid < n_keys:
        score = jnp.where(row < n_valid, score, neg)              # mask padded keys

    # ---- k argmax/mask rounds; one-hots built pre-transposed, in bf16 ----
    # TODO(synk): a packed (score, -index) single-reduce key would roughly
    # halve the per-round VPU/XLU passes but quantizes the f32 ranking; the
    # exact two-reduce form is kept so neighbour sets match lax.top_k.
    onehots = []
    for j in range(k):                                            # k is tiny / static
        smax = jnp.max(score, axis=0, keepdims=True)              # (1, tq)
        idx = jnp.min(jnp.where(score == smax, row, n_keys),
                      axis=0, keepdims=True)                      # first (lowest) argmax
        sel = row == idx                                          # (Np, tq)
        onehots.append(sel.astype(bf16))
        if j + 1 < k:
            score = jnp.where(sel, neg, score)
    onehot_all = jnp.concatenate(onehots, axis=1)                 # (Np, k*tq) bf16

    # ---- ONE gather matmul + ONE fused conv chain, channels-first ----
    # Every result below has lane width k*tq (or tq): MXU lanes fully used.
    feat = jnp.dot(xk_b, onehot_all, preferred_element_type=f32)  # (C, k*tq)
    center = jnp.concatenate([xq_b] * k, axis=1)                  # (C, k*tq)
    xin = jnp.concatenate([feat.astype(bf16), center], axis=0)    # (2C, k*tq)

    h = jnp.maximum(jnp.dot(w1, xin, preferred_element_type=f32) + b1, 0.0)
    h = jnp.maximum(jnp.dot(w2, h.astype(bf16),
                            preferred_element_type=f32) + b2, 0.0)
    h = jnp.maximum(jnp.dot(w3, h.astype(bf16),
                            preferred_element_type=f32) + b3, 0.0)  # (Co, k*tq)

    # Max over the k neighbour blocks (static, 128-aligned lane slices).
    sout = h[:, :tq]
    for j in range(1, k):
        sout = jnp.maximum(sout, h[:, j * tq:(j + 1) * tq])       # (Co, tq)

    # Residual + aconv (1x1 Conv1d) + final ReLU; one lane-dense store.
    z = x_q + sout                                                # (C, tq) f32
    out = jnp.maximum(jnp.dot(wa, z.astype(bf16),
                              preferred_element_type=f32) + ba, 0.0)
    o_ref[0] = out.astype(o_ref.dtype)                            # (Co, tq)


def _vmem_capacity_bytes():
    try:
        return int(pltpu.get_tpu_info().vmem_capacity_bytes)
    except Exception:
        return 128 << 20                       # v5e / v6e physical VMEM


def _vmem_estimate(c_in, width, c_out, n_keys, tq, k):
    """Rough per-grid-step VMEM footprint (bytes) of the fused kernel."""
    ktq = k * tq
    est = 0
    # double-buffered pipeline blocks (f32 in / out)
    est += 2 * 4 * (c_in * n_keys + c_in * tq + c_out * tq)
    # weights (bf16) + biases (f32), double-buffered
    est += 2 * 2 * (width * 2 * c_in + width * width + c_out * width + c_out * c_in)
    est += 2 * 4 * (2 * width + 2 * c_out)
    # knn scratch: bf16 keys/queries, f32 transposed keys, score/iota/masks
    est += 2 * c_in * (n_keys + tq) + 2 * 4 * c_in * n_keys
    est += 4 * 4 * n_keys * tq
    # bf16 one-hots (list + concat copy), gathered feats, fused conv input
    est += 2 * 2 * k * n_keys * tq
    est += (4 + 2) * c_in * ktq + 2 * 2 * c_in * ktq
    # conv-chain activations (f32 + bf16 casts) and outputs
    est += (4 + 2) * width * ktq + 4 * c_out * ktq + 4 * (c_in + c_out) * tq
    return est


def gcnext_forward(x, params, k, *, tq=None):
    """x: (B, C, N) float32 -> (B, C_out, N) float32 (GCNeXt forward)."""
    w1, b1, w2, b2, w3, b3, wa, ba = params
    B, C, N = x.shape
    width = w1.shape[0]
    c_out = wa.shape[0]
    assert w1.shape[1] == 2 * C and wa.shape[1] == C
    assert c_out == C, "residual add requires channel_in == channel_out"

    # Lane-dense padding of the temporal axis; padded keys are masked in-kernel
    # and padded query columns are sliced off below.
    n_pad = ((N + 127) // 128) * 128
    x_p = x if n_pad == N else jnp.pad(x, ((0, 0), (0, 0), (0, n_pad - N)))

    # Generation-aware VMEM budget: ~48 MiB on v7x (64 MiB/TC), ~96 MiB on v5e/v6e.
    vmem_budget = int(0.75 * _vmem_capacity_bytes())

    n_blk = n_pad // 128
    if tq is None:
        # Candidate query tiles: 128-multiples dividing n_pad, largest first.
        cands = [128 * m for m in range(n_blk, 0, -1) if n_blk % m == 0]
        if B % 2 == 1 and len(cands) > 1:
            # v7x megacore: with an odd batch, split the query axis so both
            # TensorCores get work (near-free on single-TC v5e/v6e).
            cands = cands[1:]
        tq = cands[-1]
        for t in cands:                        # biggest tile that fits VMEM
            if _vmem_estimate(C, width, c_out, n_pad, t, k) <= vmem_budget:
                tq = t
                break
    assert n_pad % tq == 0 and tq % 128 == 0
    n_qt = n_pad // tq

    est = _vmem_estimate(C, width, c_out, n_pad, tq, k)
    vmem_limit = int(min(max(est + (8 << 20), 16 << 20), vmem_budget))

    # bf16 MXU operands for all matmul weights (f32 accumulate in-kernel).
    bf16 = jnp.bfloat16
    w1_b, w2_b, w3_b, wa_b = (w.astype(bf16) for w in (w1, w2, w3, wa))

    def full_spec(arr):
        return pl.BlockSpec(arr.shape, lambda b, q: (0, 0))

    kern = functools.partial(_gcnext_kernel, k=k, n_valid=N)
    out = pl.pallas_call(
        kern,
        out_shape=jax.ShapeDtypeStruct((B, c_out, n_pad), jnp.float32),
        grid_spec=pltpu.PrefetchScalarGridSpec(
            num_scalar_prefetch=0,
            grid=(B, n_qt),
            in_specs=[
                pl.BlockSpec((1, C, n_pad), lambda b, q: (b, 0, 0)),  # keys (resident over q)
                pl.BlockSpec((1, C, tq), lambda b, q: (b, 0, q)),     # query tile
                full_spec(w1_b), full_spec(b1),
                full_spec(w2_b), full_spec(b2),
                full_spec(w3_b), full_spec(b3),
                full_spec(wa_b), full_spec(ba),
            ],
            out_specs=pl.BlockSpec((1, c_out, tq), lambda b, q: (b, 0, q)),
        ),
        compiler_params=pltpu.CompilerParams(
            dimension_semantics=("parallel", "parallel"),
            vmem_limit_bytes=vmem_limit),
    )(x_p, x_p, w1_b, b1, w2_b, b2, w3_b, b3, wa_b, ba)
    return out[:, :, :N] if n_pad != N else out


def init_params(key, channel_in, channel_out, groups, width_group):
    """Deterministic synthetic parameters matching GCNeXt.__init__ shapes (f32).

    Weights are kept in the natural torch (out_ch, in_ch) orientation; biases
    as (out_ch, 1) columns (channels-first broadcast).
    """
    width = width_group * groups
    ks = jax.random.split(key, 8)
    s = 0.1
    w1 = jax.random.normal(ks[0], (width, 2 * channel_in), jnp.float32) * s
    b1 = jax.random.normal(ks[1], (width,), jnp.float32) * s
    w2g = jax.random.normal(ks[2], (width, width // groups), jnp.float32) * s
    b2 = jax.random.normal(ks[3], (width,), jnp.float32) * s
    w3 = jax.random.normal(ks[4], (channel_out, width), jnp.float32) * s
    b3 = jax.random.normal(ks[5], (channel_out,), jnp.float32) * s
    wa = jax.random.normal(ks[6], (channel_out, channel_in), jnp.float32) * s
    ba = jax.random.normal(ks[7], (channel_out,), jnp.float32) * s

    # Dense block-diagonal equivalent of the grouped 1x1 conv weight.
    wpg = width // groups
    w2 = jnp.zeros((width, width), jnp.float32)
    for g in range(groups):
        w2 = w2.at[g * wpg:(g + 1) * wpg, g * wpg:(g + 1) * wpg].set(
            w2g[g * wpg:(g + 1) * wpg, :])

    return (w1, b1.reshape(width, 1), w2, b2.reshape(width, 1),
            w3, b3.reshape(channel_out, 1), wa, ba.reshape(channel_out, 1))


def gcnext_ref(x, params, k):
    """Plain-JAX reference mirroring the PyTorch forward.

    Conv math is f32; the knn ranking uses bf16-rounded coordinates so that
    kernel and reference choose the same neighbour sets (the kernel's MXU
    score path uses bf16 operands with f32 accumulation).
    """
    w1, b1, w2, b2, w3, b3, wa, ba = params
    C = x.shape[1]
    xt = jnp.transpose(x, (0, 2, 1))                              # (B, N, C) f32
    xb = xt.astype(jnp.bfloat16).astype(jnp.float32)
    gram = jnp.einsum('bmc,bnc->bmn', xb, xb)
    sq = jnp.sum(xb * xb, axis=-1)
    dist = 2.0 * gram - sq[:, None, :]        # per-query constant dropped (same top-k)
    _, idx = jax.lax.top_k(dist, k)                               # (B, N, k)
    feat = jax.vmap(lambda a, i: a[i])(xt, idx)                   # (B, N, k, C)
    h = jax.nn.relu(jnp.einsum('bnkc,wc->bnkw', feat, w1[:, :C])
                    + jnp.einsum('bnc,wc->bnw', xt, w1[:, C:])[:, :, None, :]
                    + b1[:, 0])
    h = jax.nn.relu(jnp.einsum('bnkw,vw->bnkv', h, w2) + b2[:, 0])
    h = jax.nn.relu(jnp.einsum('bnkv,ov->bnko', h, w3) + b3[:, 0])
    sout = jnp.max(h, axis=2)                                     # (B, N, C_out)
    out = jax.nn.relu(jnp.einsum('bnc,oc->bno', xt + sout, wa) + ba[:, 0])
    return jnp.transpose(out, (0, 2, 1))                          # (B, C_out, N)


if __name__ == "__main__":
    B, C, N = 2, 32, 16          # channel_in == channel_out (residual add)
    K_NEIGH = 3                  # GCNeXt default k
    GROUPS, WIDTH_GROUP = 8, 4   # width = 32 (small synthetic config)

    key = jax.random.PRNGKey(0)
    kx, kp = jax.random.split(key)
    x = jax.random.normal(kx, (B, C, N), jnp.float32)
    params = init_params(kp, C, C, GROUPS, WIDTH_GROUP)

    out = jax.block_until_ready(gcnext_forward(x, params, K_NEIGH))
    assert out.shape == (B, C, N), out.shape

    ref = gcnext_ref(x, params, K_NEIGH)
    # bf16 MXU operands (f32 accumulate) vs. f32 reference -> bf16-level tolerance.
    if not jnp.allclose(out, ref, atol=3e-2, rtol=3e-2):
        raise AssertionError("Pallas kernel output mismatches JAX reference")

    print("KERNEL_OK")
</pallas_src>

<mosaic_0001>
module attributes {stable_mosaic.version = 11 : i64} {
  func.func @_gcnext_kernel(%arg0: i32, %arg1: i32, %arg2: memref<1x32x128xf32, #tpu.memory_space<vmem>>, %arg3: memref<1x32x128xf32, #tpu.memory_space<vmem>>, %arg4: memref<32x64xbf16, #tpu.memory_space<vmem>>, %arg5: memref<32x1xf32, #tpu.memory_space<vmem>>, %arg6: memref<32x32xbf16, #tpu.memory_space<vmem>>, %arg7: memref<32x1xf32, #tpu.memory_space<vmem>>, %arg8: memref<32x32xbf16, #tpu.memory_space<vmem>>, %arg9: memref<32x1xf32, #tpu.memory_space<vmem>>, %arg10: memref<32x32xbf16, #tpu.memory_space<vmem>>, %arg11: memref<32x1xf32, #tpu.memory_space<vmem>>, %arg12: memref<1x32x128xf32, #tpu.memory_space<vmem>>) attributes {dimension_semantics = [#tpu.dimension_semantics<parallel>, #tpu.dimension_semantics<parallel>], iteration_bounds = array<i64: 2, 1>, scalar_prefetch = 0 : i64, scratch_operands = 0 : i64, tpu.core_type = #tpu.core_type<tc>, window_params = [{transform_indices = @transform_0, window_bounds = array<i64: 1, 32, 128>}, {transform_indices = @transform_1, window_bounds = array<i64: 1, 32, 128>}, {pipeline_mode = #tpu.pipeline_mode<synchronous>, transform_indices = @transform_2, window_bounds = array<i64: 32, 64>}, {pipeline_mode = #tpu.pipeline_mode<synchronous>, transform_indices = @transform_3, window_bounds = array<i64: 32, 1>}, {pipeline_mode = #tpu.pipeline_mode<synchronous>, transform_indices = @transform_4, window_bounds = array<i64: 32, 32>}, {pipeline_mode = #tpu.pipeline_mode<synchronous>, transform_indices = @transform_5, window_bounds = array<i64: 32, 1>}, {pipeline_mode = #tpu.pipeline_mode<synchronous>, transform_indices = @transform_6, window_bounds = array<i64: 32, 32>}, {pipeline_mode = #tpu.pipeline_mode<synchronous>, transform_indices = @transform_7, window_bounds = array<i64: 32, 1>}, {pipeline_mode = #tpu.pipeline_mode<synchronous>, transform_indices = @transform_8, window_bounds = array<i64: 32, 32>}, {pipeline_mode = #tpu.pipeline_mode<synchronous>, transform_indices = @transform_9, window_bounds = array<i64: 32, 1>}, {transform_indices = @transform_10, window_bounds = array<i64: 1, 32, 128>}]} {
    %c0 = arith.constant 0 : index
    %c0_0 = arith.constant 0 : index
    %c0_1 = arith.constant 0 : index
    %0 = vector.load %arg2[%c0, %c0_0, %c0_1] : memref<1x32x128xf32, #tpu.memory_space<vmem>>, vector<1x32x128xf32>
    %1 = vector.shape_cast %0 : vector<1x32x128xf32> to vector<32x128xf32>
    %c0_2 = arith.constant 0 : index
    %c0_3 = arith.constant 0 : index
    %c0_4 = arith.constant 0 : index
    %2 = vector.load %arg3[%c0_2, %c0_3, %c0_4] : memref<1x32x128xf32, #tpu.memory_space<vmem>>, vector<1x32x128xf32>
    %3 = vector.shape_cast %2 : vector<1x32x128xf32> to vector<32x128xf32>
    %c0_5 = arith.constant 0 : index
    %c0_6 = arith.constant 0 : index
    %4 = vector.load %arg4[%c0_5, %c0_6] : memref<32x64xbf16, #tpu.memory_space<vmem>>, vector<32x64xbf16>
    %c0_7 = arith.constant 0 : index
    %c0_8 = arith.constant 0 : index
    %5 = vector.load %arg5[%c0_7, %c0_8] : memref<32x1xf32, #tpu.memory_space<vmem>>, vector<32x1xf32>
    %c0_9 = arith.constant 0 : index
    %c0_10 = arith.constant 0 : index
    %6 = vector.load %arg6[%c0_9, %c0_10] : memref<32x32xbf16, #tpu.memory_space<vmem>>, vector<32x32xbf16>
    %c0_11 = arith.constant 0 : index
    %c0_12 = arith.constant 0 : index
    %7 = vector.load %arg7[%c0_11, %c0_12] : memref<32x1xf32, #tpu.memory_space<vmem>>, vector<32x1xf32>
    %c0_13 = arith.constant 0 : index
    %c0_14 = arith.constant 0 : index
    %8 = vector.load %arg8[%c0_13, %c0_14] : memref<32x32xbf16, #tpu.memory_space<vmem>>, vector<32x32xbf16>
    %c0_15 = arith.constant 0 : index
    %c0_16 = arith.constant 0 : index
    %9 = vector.load %arg9[%c0_15, %c0_16] : memref<32x1xf32, #tpu.memory_space<vmem>>, vector<32x1xf32>
    %c0_17 = arith.constant 0 : index
    %c0_18 = arith.constant 0 : index
    %10 = vector.load %arg10[%c0_17, %c0_18] : memref<32x32xbf16, #tpu.memory_space<vmem>>, vector<32x32xbf16>
    %c0_19 = arith.constant 0 : index
    %c0_20 = arith.constant 0 : index
    %11 = vector.load %arg11[%c0_19, %c0_20] : memref<32x1xf32, #tpu.memory_space<vmem>>, vector<32x1xf32>
    %12 = arith.truncf %1 : vector<32x128xf32> to vector<32x128xbf16>
    %13 = arith.truncf %3 : vector<32x128xf32> to vector<32x128xbf16>
    %14 = arith.extf %12 : vector<32x128xbf16> to vector<32x128xf32>
    %15 = tpu.transpose %14, [1, 0] : vector<32x128xf32> -> vector<128x32xf32>
    %16 = arith.mulf %15, %15 : vector<128x32xf32>
    %cst = arith.constant dense<0.000000e+00> : vector<128xf32>
    %17 = vector.multi_reduction <add>, %16, %cst [1] : vector<128x32xf32> to vector<128xf32>
    %18 = vector.shape_cast %17 : vector<128xf32> to vector<128x1xf32>
    %19 = arith.truncf %15 : vector<128x32xf32> to vector<128x32xbf16>
    %cst_21 = arith.constant dense<0.000000e+00> : vector<128x128xf32>
    %20 = tpu.matmul %19, %13, %cst_21 {dimension_numbers = #tpu.dot_dimension_numbers<[1], [0], [0], [1], [0, 0, 1, 1], [], []>} : vector<128x32xbf16>, vector<32x128xbf16>, vector<128x128xf32> -> vector<128x128xf32>
    %cst_22 = arith.constant 2.000000e+00 : f32
    %21 = vector.broadcast %cst_22 : f32 to vector<128x128xf32>
    %22 = arith.mulf %21, %20 : vector<128x128xf32>
    %23 = vector.broadcast %18 : vector<128x1xf32> to vector<128x128xf32>
    %24 = arith.subf %22, %23 : vector<128x128xf32>
    %25 = tpu.iota {dimensions = array<i32: 0>} : vector<128x128xi32>
    %c16_i32 = arith.constant 16 : i32
    %26 = vector.broadcast %c16_i32 : i32 to vector<128x128xi32>
    %27 = arith.cmpi slt, %25, %26 : vector<128x128xi32>
    %cst_23 = arith.constant -1.000000e+30 : f32
    %28 = vector.broadcast %cst_23 : f32 to vector<128x128xf32>
    %29 = arith.select %27, %24, %28 : vector<128x128xi1>, vector<128x128xf32>
    %cst_24 = arith.constant dense<0xFF800000> : vector<128xf32>
    %30 = vector.multi_reduction <maximumf>, %29, %cst_24 [0] : vector<128x128xf32> to vector<128xf32>
    %31 = vector.shape_cast %30 : vector<128xf32> to vector<1x128xf32>
    %32 = vector.broadcast %31 : vector<1x128xf32> to vector<128x128xf32>
    %33 = arith.cmpf oeq, %29, %32 : vector<128x128xf32>
    %c128_i32 = arith.constant 128 : i32
    %34 = vector.broadcast %c128_i32 : i32 to vector<128x128xi32>
    %35 = arith.select %33, %25, %34 : vector<128x128xi1>, vector<128x128xi32>
    %cst_25 = arith.constant dense<2147483647> : vector<128xi32>
    %36 = vector.multi_reduction <minsi>, %35, %cst_25 [0] : vector<128x128xi32> to vector<128xi32>
    %37 = vector.shape_cast %36 : vector<128xi32> to vector<1x128xi32>
    %38 = vector.broadcast %37 : vector<1x128xi32> to vector<128x128xi32>
    %39 = arith.cmpi eq, %25, %38 : vector<128x128xi32>
    %40 = arith.extui %39 : vector<128x128xi1> to vector<128x128xi32>
    %41 = arith.sitofp %40 : vector<128x128xi32> to vector<128x128xf32>
    %42 = arith.truncf %41 : vector<128x128xf32> to vector<128x128xbf16>
    %cst_26 = arith.constant -1.000000e+30 : f32
    %43 = vector.broadcast %cst_26 : f32 to vector<128x128xf32>
    %44 = arith.select %39, %43, %29 : vector<128x128xi1>, vector<128x128xf32>
    %cst_27 = arith.constant dense<0xFF800000> : vector<128xf32>
    %45 = vector.multi_reduction <maximumf>, %44, %cst_27 [0] : vector<128x128xf32> to vector<128xf32>
    %46 = vector.shape_cast %45 : vector<128xf32> to vector<1x128xf32>
    %47 = vector.broadcast %46 : vector<1x128xf32> to vector<128x128xf32>
    %48 = arith.cmpf oeq, %44, %47 : vector<128x128xf32>
    %c128_i32_28 = arith.constant 128 : i32
    %49 = vector.broadcast %c128_i32_28 : i32 to vector<128x128xi32>
    %50 = arith.select %48, %25, %49 : vector<128x128xi1>, vector<128x128xi32>
    %cst_29 = arith.constant dense<2147483647> : vector<128xi32>
    %51 = vector.multi_reduction <minsi>, %50, %cst_29 [0] : vector<128x128xi32> to vector<128xi32>
    %52 = vector.shape_cast %51 : vector<128xi32> to vector<1x128xi32>
    %53 = vector.broadcast %52 : vector<1x128xi32> to vector<128x128xi32>
    %54 = arith.cmpi eq, %25, %53 : vector<128x128xi32>
    %55 = arith.extui %54 : vector<128x128xi1> to vector<128x128xi32>
    %56 = arith.sitofp %55 : vector<128x128xi32> to vector<128x128xf32>
    %57 = arith.truncf %56 : vector<128x128xf32> to vector<128x128xbf16>
    %cst_30 = arith.constant -1.000000e+30 : f32
    %58 = vector.broadcast %cst_30 : f32 to vector<128x128xf32>
    %59 = arith.select %54, %58, %44 : vector<128x128xi1>, vector<128x128xf32>
    %cst_31 = arith.constant dense<0xFF800000> : vector<128xf32>
    %60 = vector.multi_reduction <maximumf>, %59, %cst_31 [0] : vector<128x128xf32> to vector<128xf32>
    %61 = vector.shape_cast %60 : vector<128xf32> to vector<1x128xf32>
    %62 = vector.broadcast %61 : vector<1x128xf32> to vector<128x128xf32>
    %63 = arith.cmpf oeq, %59, %62 : vector<128x128xf32>
    %c128_i32_32 = arith.constant 128 : i32
    %64 = vector.broadcast %c128_i32_32 : i32 to vector<128x128xi32>
    %65 = arith.select %63, %25, %64 : vector<128x128xi1>, vector<128x128xi32>
    %cst_33 = arith.constant dense<2147483647> : vector<128xi32>
    %66 = vector.multi_reduction <minsi>, %65, %cst_33 [0] : vector<128x128xi32> to vector<128xi32>
    %67 = vector.shape_cast %66 : vector<128xi32> to vector<1x128xi32>
    %68 = vector.broadcast %67 : vector<1x128xi32> to vector<128x128xi32>
    %69 = arith.cmpi eq, %25, %68 : vector<128x128xi32>
    %70 = arith.extui %69 : vector<128x128xi1> to vector<128x128xi32>
    %71 = arith.sitofp %70 : vector<128x128xi32> to vector<128x128xf32>
    %72 = arith.truncf %71 : vector<128x128xf32> to vector<128x128xbf16>
    %73 = tpu.concatenate %42, %57, %72 in 1 : vector<128x128xbf16>, vector<128x128xbf16>, vector<128x128xbf16> -> vector<128x384xbf16>
    %cst_34 = arith.constant dense<0.000000e+00> : vector<32x384xf32>
    %74 = tpu.matmul %12, %73, %cst_34 {dimension_numbers = #tpu.dot_dimension_numbers<[1], [0], [0], [1], [0, 0, 1, 1], [], []>} : vector<32x128xbf16>, vector<128x384xbf16>, vector<32x384xf32> -> vector<32x384xf32>
    %75 = tpu.concatenate %13, %13, %13 in 1 : vector<32x128xbf16>, vector<32x128xbf16>, vector<32x128xbf16> -> vector<32x384xbf16>
    %76 = arith.truncf %74 : vector<32x384xf32> to vector<32x384xbf16>
    %77 = tpu.concatenate %76, %75 in 0 : vector<32x384xbf16>, vector<32x384xbf16> -> vector<64x384xbf16>
    %cst_35 = arith.constant dense<0.000000e+00> : vector<32x384xf32>
    %78 = tpu.matmul %4, %77, %cst_35 {dimension_numbers = #tpu.dot_dimension_numbers<[1], [0], [0], [1], [0, 0, 1, 1], [], []>} : vector<32x64xbf16>, vector<64x384xbf16>, vector<32x384xf32> -> vector<32x384xf32>
    %79 = vector.broadcast %5 : vector<32x1xf32> to vector<32x384xf32>
    %80 = arith.addf %78, %79 : vector<32x384xf32>
    %cst_36 = arith.constant 0.000000e+00 : f32
    %81 = vector.broadcast %cst_36 : f32 to vector<32x384xf32>
    %82 = arith.maximumf %80, %81 : vector<32x384xf32>
    %83 = arith.truncf %82 : vector<32x384xf32> to vector<32x384xbf16>
    %cst_37 = arith.constant dense<0.000000e+00> : vector<32x384xf32>
    %84 = tpu.matmul %6, %83, %cst_37 {dimension_numbers = #tpu.dot_dimension_numbers<[1], [0], [0], [1], [0, 0, 1, 1], [], []>} : vector<32x32xbf16>, vector<32x384xbf16>, vector<32x384xf32> -> vector<32x384xf32>
    %85 = vector.broadcast %7 : vector<32x1xf32> to vector<32x384xf32>
    %86 = arith.addf %84, %85 : vector<32x384xf32>
    %cst_38 = arith.constant 0.000000e+00 : f32
    %87 = vector.broadcast %cst_38 : f32 to vector<32x384xf32>
    %88 = arith.maximumf %86, %87 : vector<32x384xf32>
    %89 = arith.truncf %88 : vector<32x384xf32> to vector<32x384xbf16>
    %cst_39 = arith.constant dense<0.000000e+00> : vector<32x384xf32>
    %90 = tpu.matmul %8, %89, %cst_39 {dimension_numbers = #tpu.dot_dimension_numbers<[1], [0], [0], [1], [0, 0, 1, 1], [], []>} : vector<32x32xbf16>, vector<32x384xbf16>, vector<32x384xf32> -> vector<32x384xf32>
    %91 = vector.broadcast %9 : vector<32x1xf32> to vector<32x384xf32>
    %92 = arith.addf %90, %91 : vector<32x384xf32>
    %cst_40 = arith.constant 0.000000e+00 : f32
    %93 = vector.broadcast %cst_40 : f32 to vector<32x384xf32>
    %94 = arith.maximumf %92, %93 : vector<32x384xf32>
    %95 = vector.extract_strided_slice %94 {offsets = [0, 0], sizes = [32, 128], strides = [1, 1]} : vector<32x384xf32> to vector<32x128xf32>
    %96 = vector.extract_strided_slice %94 {offsets = [0, 128], sizes = [32, 128], strides = [1, 1]} : vector<32x384xf32> to vector<32x128xf32>
    %97 = arith.maximumf %95, %96 : vector<32x128xf32>
    %98 = vector.extract_strided_slice %94 {offsets = [0, 256], sizes = [32, 128], strides = [1, 1]} : vector<32x384xf32> to vector<32x128xf32>
    %99 = arith.maximumf %97, %98 : vector<32x128xf32>
    %100 = arith.addf %3, %99 : vector<32x128xf32>
    %101 = arith.truncf %100 : vector<32x128xf32> to vector<32x128xbf16>
    %cst_41 = arith.constant dense<0.000000e+00> : vector<32x128xf32>
    %102 = tpu.matmul %10, %101, %cst_41 {dimension_numbers = #tpu.dot_dimension_numbers<[1], [0], [0], [1], [0, 0, 1, 1], [], []>} : vector<32x32xbf16>, vector<32x128xbf16>, vector<32x128xf32> -> vector<32x128xf32>
    %103 = vector.broadcast %11 : vector<32x1xf32> to vector<32x128xf32>
    %104 = arith.addf %102, %103 : vector<32x128xf32>
    %cst_42 = arith.constant 0.000000e+00 : f32
    %105 = vector.broadcast %cst_42 : f32 to vector<32x128xf32>
    %106 = arith.maximumf %104, %105 : vector<32x128xf32>
    %c0_43 = arith.constant 0 : index
    %c0_44 = arith.constant 0 : index
    %c0_45 = arith.constant 0 : index
    %107 = vector.load %arg12[%c0_43, %c0_44, %c0_45] : memref<1x32x128xf32, #tpu.memory_space<vmem>>, vector<1x32x128xf32>
    %108 = vector.shape_cast %107 : vector<1x32x128xf32> to vector<32x128xf32>
    %109 = vector.shape_cast %106 : vector<32x128xf32> to vector<1x32x128xf32>
    tpu.vector_store %arg12[%c0_43, %c0_44, %c0_45], %109 {strides = array<i32>} : memref<1x32x128xf32, #tpu.memory_space<vmem>>, vector<1x32x128xf32>,
    return
  }
  func.func @transform_0(%arg0: i32, %arg1: i32) -> (i32, i32, i32) {
    %c0_i32 = arith.constant 0 : i32
    %c0_i32_0 = arith.constant 0 : i32
    %c0_i32_1 = arith.constant 0 : i32
    return %arg0, %c0_i32, %c0_i32_0 : i32, i32, i32
  }
  func.func @transform_1(%arg0: i32, %arg1: i32) -> (i32, i32, i32) {
    %c0_i32 = arith.constant 0 : i32
    %c0_i32_0 = arith.constant 0 : i32
    return %arg0, %c0_i32, %arg1 : i32, i32, i32
  }
  func.func @transform_2(%arg0: i32, %arg1: i32) -> (i32, i32) {
    %c0_i32 = arith.constant 0 : i32
    %c0_i32_0 = arith.constant 0 : i32
    %c0_i32_1 = arith.constant 0 : i32
    return %c0_i32, %c0_i32_0 : i32, i32
  }
  func.func @transform_3(%arg0: i32, %arg1: i32) -> (i32, i32) {
    %c0_i32 = arith.constant 0 : i32
    %c0_i32_0 = arith.constant 0 : i32
    %c0_i32_1 = arith.constant 0 : i32
    return %c0_i32, %c0_i32_0 : i32, i32
  }
  func.func @transform_4(%arg0: i32, %arg1: i32) -> (i32, i32) {
    %c0_i32 = arith.constant 0 : i32
    %c0_i32_0 = arith.constant 0 : i32
    %c0_i32_1 = arith.constant 0 : i32
    return %c0_i32, %c0_i32_0 : i32, i32
  }
  func.func @transform_5(%arg0: i32, %arg1: i32) -> (i32, i32) {
    %c0_i32 = arith.constant 0 : i32
    %c0_i32_0 = arith.constant 0 : i32
    %c0_i32_1 = arith.constant 0 : i32
    return %c0_i32, %c0_i32_0 : i32, i32
  }
  func.func @transform_6(%arg0: i32, %arg1: i32) -> (i32, i32) {
    %c0_i32 = arith.constant 0 : i32
    %c0_i32_0 = arith.constant 0 : i32
    %c0_i32_1 = arith.constant 0 : i32
    return %c0_i32, %c0_i32_0 : i32, i32
  }
  func.func @transform_7(%arg0: i32, %arg1: i32) -> (i32, i32) {
    %c0_i32 = arith.constant 0 : i32
    %c0_i32_0 = arith.constant 0 : i32
    %c0_i32_1 = arith.constant 0 : i32
    return %c0_i32, %c0_i32_0 : i32, i32
  }
  func.func @transform_8(%arg0: i32, %arg1: i32) -> (i32, i32) {
    %c0_i32 = arith.constant 0 : i32
    %c0_i32_0 = arith.constant 0 : i32
    %c0_i32_1 = arith.constant 0 : i32
    return %c0_i32, %c0_i32_0 : i32, i32
  }
  func.func @transform_9(%arg0: i32, %arg1: i32) -> (i32, i32) {
    %c0_i32 = arith.constant 0 : i32
    %c0_i32_0 = arith.constant 0 : i32
    %c0_i32_1 = arith.constant 0 : i32
    return %c0_i32, %c0_i32_0 : i32, i32
  }
  func.func @transform_10(%arg0: i32, %arg1: i32) -> (i32, i32, i32) {
    %c0_i32 = arith.constant 0 : i32
    %c0_i32_0 = arith.constant 0 : i32
    return %arg0, %c0_i32, %arg1 : i32, i32, i32
  }
}

</mosaic_0001>

<llo_original>
// kernel: tpu_custom_call.1
$region0: #{tpu_custom_call.1}
  #allocation0 [shape = 'u32[]', space=smem, size = 0x4, offset = 0x4, fixed_abs, tag = 'smem constant byte address 0x4 - core index']
  #allocation1 [shape = 'u32[144,128]{1,0:T(1,128)}', space=vmem, size = 0x12000, scoped, tag = 'internal scratch']
  %s0 = inlined_call_operand.vmem [shape: f32[2,32,128], index: 0, kind: input, shape index: {}]
  %s1 = inlined_call_operand.vmem [shape: f32[2,32,128], index: 1, kind: input, shape index: {}]
  %s2 = inlined_call_operand.hbm [shape: bf16[32,64], index: 2, kind: input, shape index: {}]
  %s3 = inlined_call_operand.vmem [shape: f32[32,1], index: 3, kind: input, shape index: {}]
  %s4 = inlined_call_operand.vmem [shape: bf16[32,32], index: 4, kind: input, shape index: {}]
  %s5 = inlined_call_operand.vmem [shape: f32[32,1], index: 5, kind: input, shape index: {}]
  %s6 = inlined_call_operand.hbm [shape: bf16[32,32], index: 6, kind: input, shape index: {}]
  %s7 = inlined_call_operand.vmem [shape: f32[32,1], index: 7, kind: input, shape index: {}]
  %s8 = inlined_call_operand.vmem [shape: bf16[32,32], index: 8, kind: input, shape index: {}]
  %s9 = inlined_call_operand.vmem [shape: f32[32,1], index: 9, kind: input, shape index: {}]
  %s10 = inlined_call_operand.hbm [shape: f32[2,32,128], index: 10, kind: output, shape index: {}]
  %s11 = sld [smem:[#allocation0]]
  $region81: #{tpu_custom_call.1} parent=0
    _
  %s13 = ssub.s32 1, %s11
  %s14 = scalar_select 0, %s13, %s11
  $region1: #{tpu_custom_call.1} parent=0
    #allocation2 [shape = 'u8[8192]{0}', space=vmem, size = 0x2000, scoped, tag = 'input window, operand 2, single buffered']
    #allocation3 [shape = 's32[2]{0}', space=sflag, size = 0x8, scoped, tag = 'scoped memory for tpu_custom_call.1']
    #allocation4 [shape = 's32[2]{0}', space=sflag, size = 0x8, scoped, tag = 'scoped memory for tpu_custom_call.1']
    #allocation5 [shape = 'u8[8192]{0}', space=vmem, size = 0x2000, scoped, tag = 'input window, operand 6, single buffered']
    #allocation6 [shape = 's32[1]{0}', space=sflag, size = 0x4, scoped, tag = 'scoped memory for tpu_custom_call.1']
    #allocation7 [shape = 'u8[32768]{0}', space=vmem, size = 0x8000, scoped, tag = 'output window, operand 0']
    %15 = vsyncpa [#allocation3], 0
    %16 = vsyncpa [#allocation6], 0
    %17 = vsyncpa [#allocation4], 0
    %s18 = scalar_lea.sflag [#allocation4], 1
    %19 = vsyncpa %s18, 0
    loop: start=0, step=1, limit=4
    $region2: #{tpu_custom_call.1} parent=1 // loop_pre_header
      _
    $region3: #{tpu_custom_call.1} parent=1 // loop_header
      %s21 = sphi 0, %s25
      %p22 = scmp.ge.s32.totalorder %s21, 4
      %s28 = sphi 0, %s40
      %s29 = sphi 0, %s36
      %s30 = sphi 0, %s28
      %s31 = sphi 0, %s29
      %s32 = sphi 0, %s30
      %s33 = sphi 0, %s31
      %s43 = sphi 0, %s45
      %s46 = sphi 0, %s43
      %s47 = sphi 0, %s46
      %s63 = sphi 0, %s47
      %s71 = sphi 0, %s73
      %s74 = sphi 0, %s71
      %s75 = sphi 0, %s74
      %s91 = sphi 0, %s75
      %s95 = sphi 0, %s95
      %s97 = sphi 0, %s95
      %s98 = sphi 0, %s97
      %s112 = sphi 0, %s98
      %s116 = sphi 0, %s116
      %s118 = sphi 0, %s116
      %s119 = sphi 0, %s118
      %s133 = sphi 0, %s119
      %s137 = sphi 0, %s137
      %s139 = sphi 0, %s137
      %s140 = sphi 0, %s139
      %s154 = sphi 0, %s140
      %s158 = sphi 0, %s158
      %s160 = sphi 0, %s158
      %s161 = sphi 0, %s160
      %s175 = sphi 0, %s161
      %s179 = sphi 0, %s179
      %s181 = sphi 0, %s179
      %s182 = sphi 0, %s181
      %s196 = sphi 0, %s182
      %s200 = sphi 0, %s200
      %s202 = sphi 0, %s200
      %s203 = sphi 0, %s202
      %s217 = sphi 0, %s203
      %s221 = sphi 0, %s221
      %s223 = sphi 0, %s221
      %s224 = sphi 0, %s223
      %s238 = sphi 0, %s224
      %s242 = sphi 0, %s242
      %s244 = sphi 0, %s242
      %s245 = sphi 0, %s244
      %s259 = sphi 0, %s245
      %s267 = sphi 0, %s269
      %s270 = sphi 0, %s267
      %s271 = sphi 0, %s270
      %s287 = sphi 0, %s271
    $region4: #{tpu_custom_call.1} parent=1 // loop_header_branch
      %24 = sbr.rel (%p22) target = $region8
    $region5: #{tpu_custom_call.1} parent=1 // loop_body
      %s26 = ssub.s32 %s21, 1
      %s27 = ssub.s32 %s21, 2
      %s34 = sadd.s32 1, %s29
      %p35 = scmp.ge.s32.totalorder %s34, 1
      %s36 = scalar_select %p35, 0, %s34
      %s37 = sadd.s32 1, %s28
      %s38 = scalar_select %p35, %s37, %s28
      %p39 = scmp.ge.s32.totalorder %s38, 2
      %s40 = scalar_select %p39, 0, %s38
      %s41 = ssub.s32 %s28, %s40
      %p42 = scmp.eq.s32.totalorder %s41, 0
      %s44 = sadd.s32 %s43, 1
      %s45 = scalar_select %p42, %s43, %s44
      %p48 = pneg %p42
      %p49 = scmp.eq.s32.totalorder %s21, 1
      %p50 = por %p48, %p49
      %p51 = scmp.ne.s32.totalorder %s43, %s46
      %p52 = scmp.eq.s32.totalorder %s21, 0
      %p53 = por %p51, %p52
      %p54 = scmp.ne.s32.totalorder %s43, %s46
      %p55 = scmp.eq.s32.totalorder %s26, 1
      %p56 = por %p54, %p55
      %p57 = scmp.ne.s32.totalorder %s46, %s47
      %p58 = scmp.eq.s32.totalorder %s26, 0
      %p59 = por %p57, %p58
      %p60 = scmp.ne.s32.totalorder %s46, %s47
      %p61 = scmp.eq.s32.totalorder %s27, 1
      %p62 = por %p60, %p61
      %p64 = scmp.ne.s32.totalorder %s47, %s63
      %p65 = scmp.eq.s32.totalorder %s27, 0
      %p66 = por %p64, %p65
      %s67 = ssub.s32 %s28, %s40
      %s68 = ssub.s32 %s29, %s36
      %s69 = sor.u32 %s67, %s68
      %p70 = scmp.eq.s32.totalorder %s69, 0
      %s72 = sadd.s32 %s71, 1
      %s73 = scalar_select %p70, %s71, %s72
      %p76 = pneg %p70
      %p77 = scmp.eq.s32.totalorder %s21, 1
      %p78 = por %p76, %p77
      %p79 = scmp.ne.s32.totalorder %s71, %s74
      %p80 = scmp.eq.s32.totalorder %s21, 0
      %p81 = por %p79, %p80
      %p82 = scmp.ne.s32.totalorder %s71, %s74
      %p83 = scmp.eq.s32.totalorder %s26, 1
      %p84 = por %p82, %p83
      %p85 = scmp.ne.s32.totalorder %s74, %s75
      %p86 = scmp.eq.s32.totalorder %s26, 0
      %p87 = por %p85, %p86
      %p88 = scmp.ne.s32.totalorder %s74, %s75
      %p89 = scmp.eq.s32.totalorder %s27, 1
      %p90 = por %p88, %p89
      %p92 = scmp.ne.s32.totalorder %s75, %s91
      %p93 = scmp.eq.s32.totalorder %s27, 0
      %p94 = por %p92, %p93
      %s96 = sadd.s32 %s95, 1
      %p99 = scmp.eq.s32.totalorder %s21, 1
      %p100 = scmp.ne.s32.totalorder %s95, %s97
      %p101 = scmp.eq.s32.totalorder %s21, 0
      %p102 = por %p100, %p101
      %p103 = scmp.ne.s32.totalorder %s95, %s97
      %p104 = scmp.eq.s32.totalorder %s26, 1
      %p105 = por %p103, %p104
      %p106 = scmp.ne.s32.totalorder %s97, %s98
      %p107 = scmp.eq.s32.totalorder %s26, 0
      %p108 = por %p106, %p107
      %p109 = scmp.ne.s32.totalorder %s97, %s98
      %p110 = scmp.eq.s32.totalorder %s27, 1
      %p111 = por %p109, %p110
      %p113 = scmp.ne.s32.totalorder %s98, %s112
      %p114 = scmp.eq.s32.totalorder %s27, 0
      %p115 = por %p113, %p114
      %s117 = sadd.s32 %s116, 1
      %p120 = scmp.eq.s32.totalorder %s21, 1
      %p121 = scmp.ne.s32.totalorder %s116, %s118
      %p122 = scmp.eq.s32.totalorder %s21, 0
      %p123 = por %p121, %p122
      %p124 = scmp.ne.s32.totalorder %s116, %s118
      %p125 = scmp.eq.s32.totalorder %s26, 1
      %p126 = por %p124, %p125
      %p127 = scmp.ne.s32.totalorder %s118, %s119
      %p128 = scmp.eq.s32.totalorder %s26, 0
      %p129 = por %p127, %p128
      %p130 = scmp.ne.s32.totalorder %s118, %s119
      %p131 = scmp.eq.s32.totalorder %s27, 1
      %p132 = por %p130, %p131
      %p134 = scmp.ne.s32.totalorder %s119, %s133
      %p135 = scmp.eq.s32.totalorder %s27, 0
      %p136 = por %p134, %p135
      %s138 = sadd.s32 %s137, 1
      %p141 = scmp.eq.s32.totalorder %s21, 1
      %p142 = scmp.ne.s32.totalorder %s137, %s139
      %p143 = scmp.eq.s32.totalorder %s21, 0
      %p144 = por %p142, %p143
      %p145 = scmp.ne.s32.totalorder %s137, %s139
      %p146 = scmp.eq.s32.totalorder %s26, 1
      %p147 = por %p145, %p146
      %p148 = scmp.ne.s32.totalorder %s139, %s140
      %p149 = scmp.eq.s32.totalorder %s26, 0
      %p150 = por %p148, %p149
      %p151 = scmp.ne.s32.totalorder %s139, %s140
      %p152 = scmp.eq.s32.totalorder %s27, 1
      %p153 = por %p151, %p152
      %p155 = scmp.ne.s32.totalorder %s140, %s154
      %p156 = scmp.eq.s32.totalorder %s27, 0
      %p157 = por %p155, %p156
      %s159 = sadd.s32 %s158, 1
      %p162 = scmp.eq.s32.totalorder %s21, 1
      %p163 = scmp.ne.s32.totalorder %s158, %s160
      %p164 = scmp.eq.s32.totalorder %s21, 0
      %p165 = por %p163, %p164
      %p166 = scmp.ne.s32.totalorder %s158, %s160
      %p167 = scmp.eq.s32.totalorder %s26, 1
      %p168 = por %p166, %p167
      %p169 = scmp.ne.s32.totalorder %s160, %s161
      %p170 = scmp.eq.s32.totalorder %s26, 0
      %p171 = por %p169, %p170
      %p172 = scmp.ne.s32.totalorder %s160, %s161
      %p173 = scmp.eq.s32.totalorder %s27, 1
      %p174 = por %p172, %p173
      %p176 = scmp.ne.s32.totalorder %s161, %s175
      %p177 = scmp.eq.s32.totalorder %s27, 0
      %p178 = por %p176, %p177
      %s180 = sadd.s32 %s179, 1
      %p183 = scmp.eq.s32.totalorder %s21, 1
      %p184 = scmp.ne.s32.totalorder %s179, %s181
      %p185 = scmp.eq.s32.totalorder %s21, 0
      %p186 = por %p184, %p185
      %p187 = scmp.ne.s32.totalorder %s179, %s181
      %p188 = scmp.eq.s32.totalorder %s26, 1
      %p189 = por %p187, %p188
      %p190 = scmp.ne.s32.totalorder %s181, %s182
      %p191 = scmp.eq.s32.totalorder %s26, 0
      %p192 = por %p190, %p191
      %p193 = scmp.ne.s32.totalorder %s181, %s182
      %p194 = scmp.eq.s32.totalorder %s27, 1
      %p195 = por %p193, %p194
      %p197 = scmp.ne.s32.totalorder %s182, %s196
      %p198 = scmp.eq.s32.totalorder %s27, 0
      %p199 = por %p197, %p198
      %s201 = sadd.s32 %s200, 1
      %p204 = scmp.eq.s32.totalorder %s21, 1
      %p205 = scmp.ne.s32.totalorder %s200, %s202
      %p206 = scmp.eq.s32.totalorder %s21, 0
      %p207 = por %p205, %p206
      %p208 = scmp.ne.s32.totalorder %s200, %s202
      %p209 = scmp.eq.s32.totalorder %s26, 1
      %p210 = por %p208, %p209
      %p211 = scmp.ne.s32.totalorder %s202, %s203
      %p212 = scmp.eq.s32.totalorder %s26, 0
      %p213 = por %p211, %p212
      %p214 = scmp.ne.s32.totalorder %s202, %s203
      %p215 = scmp.eq.s32.totalorder %s27, 1
      %p216 = por %p214, %p215
      %p218 = scmp.ne.s32.totalorder %s203, %s217
      %p219 = scmp.eq.s32.totalorder %s27, 0
      %p220 = por %p218, %p219
      %s222 = sadd.s32 %s221, 1
      %p225 = scmp.eq.s32.totalorder %s21, 1
      %p226 = scmp.ne.s32.totalorder %s221, %s223
      %p227 = scmp.eq.s32.totalorder %s21, 0
      %p228 = por %p226, %p227
      %p229 = scmp.ne.s32.totalorder %s221, %s223
      %p230 = scmp.eq.s32.totalorder %s26, 1
      %p231 = por %p229, %p230
      %p232 = scmp.ne.s32.totalorder %s223, %s224
      %p233 = scmp.eq.s32.totalorder %s26, 0
      %p234 = por %p232, %p233
      %p235 = scmp.ne.s32.totalorder %s223, %s224
      %p236 = scmp.eq.s32.totalorder %s27, 1
      %p237 = por %p235, %p236
      %p239 = scmp.ne.s32.totalorder %s224, %s238
      %p240 = scmp.eq.s32.totalorder %s27, 0
      %p241 = por %p239, %p240
      %s243 = sadd.s32 %s242, 1
      %p246 = scmp.eq.s32.totalorder %s21, 1
      %p247 = scmp.ne.s32.totalorder %s242, %s244
      %p248 = scmp.eq.s32.totalorder %s21, 0
      %p249 = por %p247, %p248
      %p250 = scmp.ne.s32.totalorder %s242, %s244
      %p251 = scmp.eq.s32.totalorder %s26, 1
      %p252 = por %p250, %p251
      %p253 = scmp.ne.s32.totalorder %s244, %s245
      %p254 = scmp.eq.s32.totalorder %s26, 0
      %p255 = por %p253, %p254
      %p256 = scmp.ne.s32.totalorder %s244, %s245
      %p257 = scmp.eq.s32.totalorder %s27, 1
      %p258 = por %p256, %p257
      %p260 = scmp.ne.s32.totalorder %s245, %s259
      %p261 = scmp.eq.s32.totalorder %s27, 0
      %p262 = por %p260, %p261
      %s263 = ssub.s32 %s28, %s40
      %s264 = ssub.s32 %s29, %s36
      %s265 = sor.u32 %s263, %s264
      %p266 = scmp.eq.s32.totalorder %s265, 0
      %s268 = sadd.s32 %s267, 1
      %s269 = scalar_select %p266, %s267, %s268
      %p272 = pneg %p266
      %p273 = scmp.eq.s32.totalorder %s21, 1
      %p274 = por %p272, %p273
      %p275 = scmp.ne.s32.totalorder %s267, %s270
      %p276 = scmp.eq.s32.totalorder %s21, 0
      %p277 = por %p275, %p276
      %p278 = scmp.ne.s32.totalorder %s267, %s270
      %p279 = scmp.eq.s32.totalorder %s26, 1
      %p280 = por %p278, %p279
      %p281 = scmp.ne.s32.totalorder %s270, %s271
      %p282 = scmp.eq.s32.totalorder %s26, 0
      %p283 = por %p281, %p282
      %p284 = scmp.ne.s32.totalorder %s270, %s271
      %p285 = scmp.eq.s32.totalorder %s27, 1
      %p286 = por %p284, %p285
      %p288 = scmp.ne.s32.totalorder %s271, %s287
      %p289 = scmp.eq.s32.totalorder %s27, 0
      %p290 = por %p288, %p289
      %p291 = scmp.le.s32.totalorder 1, %s21
      %p292 = scmp.lt.s32.totalorder %s21, 3
      %p293 = pnand %p291, %p292
      %p294 = pneg %p293
      // Predicated region
      $region9: #{tpu_custom_call.1} parent=5 // pred_check
        _
      $region10: #{tpu_custom_call.1} parent=5 // pred_check_branch
        %296 = sbr.rel (%p293) target = $region12
      $region11: #{tpu_custom_call.1} parent=5 // pred_region
        %s297 = ssub.s32 %s21, 1
        // Predicated region
        $region13: #{tpu_custom_call.1} parent=11 // pred_check
          %p298 = pneg %p108
        $region14: #{tpu_custom_call.1} parent=11 // pred_check_branch
          %300 = sbr.rel (%p298) target = $region16
        $region15: #{tpu_custom_call.1} parent=11 // pred_region
          %s302 = ssub.s32 256, 256
          %303 = vsyncadd [#allocation3], %s302
          %s304 = sshll.u32 [#allocation2], 4
          %s305 = int_to_ptr.vmem [resolvable:$true] %s304
          %310 = dma.hbm_to_vmem [thread:$0]  %s2, 256, %s305, [#allocation3], 64, 64, 4
        $region16: #{tpu_custom_call.1} parent=11 // pred_fallthru
          _
        // Predicated region
        $region17: #{tpu_custom_call.1} parent=11 // pred_check
          %p311 = pneg %p129
        $region18: #{tpu_custom_call.1} parent=11 // pred_check_branch
          %313 = sbr.rel (%p311) target = $region20
        $region19: #{tpu_custom_call.1} parent=11 // pred_region
          _
        $region20: #{tpu_custom_call.1} parent=11 // pred_fallthru
          _
        // Predicated region
        $region21: #{tpu_custom_call.1} parent=11 // pred_check
          %p314 = pneg %p150
        $region22: #{tpu_custom_call.1} parent=11 // pred_check_branch
          %316 = sbr.rel (%p314) target = $region24
        $region23: #{tpu_custom_call.1} parent=11 // pred_region
          _
        $region24: #{tpu_custom_call.1} parent=11 // pred_fallthru
          _
        // Predicated region
        $region25: #{tpu_custom_call.1} parent=11 // pred_check
          %p317 = pneg %p171
        $region26: #{tpu_custom_call.1} parent=11 // pred_check_branch
          %319 = sbr.rel (%p317) target = $region28
        $region27: #{tpu_custom_call.1} parent=11 // pred_region
          _
        $region28: #{tpu_custom_call.1} parent=11 // pred_fallthru
          _
        // Predicated region
        $region29: #{tpu_custom_call.1} parent=11 // pred_check
          %p320 = pneg %p192
        $region30: #{tpu_custom_call.1} parent=11 // pred_check_branch
          %322 = sbr.rel (%p320) target = $region32
        $region31: #{tpu_custom_call.1} parent=11 // pred_region
          %s324 = ssub.s32 256, 256
          %325 = vsyncadd [#allocation6], %s324
          %s326 = sshll.u32 [#allocation5], 4
          %s327 = int_to_ptr.vmem [resolvable:$true] %s326
          %332 = dma.hbm_to_vmem [thread:$0]  %s6, 256, %s327, [#allocation6], 64, 64, 4
        $region32: #{tpu_custom_call.1} parent=11 // pred_fallthru
          _
        // Predicated region
        $region33: #{tpu_custom_call.1} parent=11 // pred_check
          %p333 = pneg %p213
        $region34: #{tpu_custom_call.1} parent=11 // pred_check_branch
          %335 = sbr.rel (%p333) target = $region36
        $region35: #{tpu_custom_call.1} parent=11 // pred_region
          _
        $region36: #{tpu_custom_call.1} parent=11 // pred_fallthru
          _
        // Predicated region
        $region37: #{tpu_custom_call.1} parent=11 // pred_check
          %p336 = pneg %p234
        $region38: #{tpu_custom_call.1} parent=11 // pred_check_branch
          %338 = sbr.rel (%p336) target = $region40
        $region39: #{tpu_custom_call.1} parent=11 // pred_region
          _
        $region40: #{tpu_custom_call.1} parent=11 // pred_fallthru
          _
        // Predicated region
        $region41: #{tpu_custom_call.1} parent=11 // pred_check
          %p339 = pneg %p255
        $region42: #{tpu_custom_call.1} parent=11 // pred_check_branch
          %341 = sbr.rel (%p339) target = $region44
        $region43: #{tpu_custom_call.1} parent=11 // pred_region
          _
        $region44: #{tpu_custom_call.1} parent=11 // pred_fallthru
          _
      $region12: #{tpu_custom_call.1} parent=5 // pred_fallthru
        _
      %p342 = scmp.lt.s32.totalorder %s21, 2
      // Predicated region
      $region45: #{tpu_custom_call.1} parent=5 // pred_check
        %p343 = pneg %p342
      $region46: #{tpu_custom_call.1} parent=5 // pred_check_branch
        %345 = sbr.rel (%p343) target = $region48
      $region47: #{tpu_custom_call.1} parent=5 // pred_region
        // Predicated region
        $region49: #{tpu_custom_call.1} parent=47 // pred_check
          %p346 = pneg %p53
        $region50: #{tpu_custom_call.1} parent=47 // pred_check_branch
          %348 = sbr.rel (%p346) target = $region52
        $region51: #{tpu_custom_call.1} parent=47 // pred_region
          %p349 = scmp.lt.s32.totalorder %s28, 1
          %s350 = scalar_select %p349, %s28, 1
          %s351 = smul.addr %s350, 4
          %s352 = smul.addr %s351, 8
          %s353 = scalar_lea.vmem %s0, %s352
        $region52: #{tpu_custom_call.1} parent=47 // pred_fallthru
          _
        // Predicated region
        $region53: #{tpu_custom_call.1} parent=47 // pred_check
          %p354 = pneg %p81
        $region54: #{tpu_custom_call.1} parent=47 // pred_check_branch
          %356 = sbr.rel (%p354) target = $region56
        $region55: #{tpu_custom_call.1} parent=47 // pred_region
          %p357 = scmp.lt.s32.totalorder %s28, 1
          %s358 = scalar_select %p357, %s28, 1
          %p359 = scmp.lt.s32.totalorder %s29, 0
          %s360 = scalar_select %p359, %s29, 0
          %s361 = smul.addr %s358, 4
          %s362 = sadd.s32 %s360, %s361
          %s363 = smul.addr %s362, 8
          %s364 = scalar_lea.vmem %s1, %s363
        $region56: #{tpu_custom_call.1} parent=47 // pred_fallthru
          _
      $region48: #{tpu_custom_call.1} parent=5 // pred_fallthru
        _
      %p365 = scmp.le.s32.totalorder 1, %s21
      %p366 = scmp.lt.s32.totalorder %s21, 3
      %p367 = pnand %p365, %p366
      %p368 = pneg %p367
      // Predicated region
      $region57: #{tpu_custom_call.1} parent=5 // pred_check
        _
      $region58: #{tpu_custom_call.1} parent=5 // pred_check_branch
        %370 = sbr.rel (%p367) target = $region60
      $region59: #{tpu_custom_call.1} parent=5 // pred_region
        %s371 = ssub.s32 %s21, 1
        // Predicated region
        $region61: #{tpu_custom_call.1} parent=59 // pred_check
          %p372 = pneg %p108
        $region62: #{tpu_custom_call.1} parent=59 // pred_check_branch
          %374 = sbr.rel (%p372) target = $region64
        $region63: #{tpu_custom_call.1} parent=59 // pred_region
          %375 = dma.done [#allocation3], 256
        $region64: #{tpu_custom_call.1} parent=59 // pred_fallthru
          _
        // Predicated region
        $region65: #{tpu_custom_call.1} parent=59 // pred_check
          %p376 = pneg %p192
        $region66: #{tpu_custom_call.1} parent=59 // pred_check_branch
          %378 = sbr.rel (%p376) target = $region68
        $region67: #{tpu_custom_call.1} parent=59 // pred_region
          %379 = dma.done [#allocation6], 256
        $region68: #{tpu_custom_call.1} parent=59 // pred_fallthru
          _
        %p380 = scmp.lt.s32.totalorder %s30, 1
        %s381 = scalar_select %p380, %s30, 1
        %s382 = smul.addr %s381, 4
        %s383 = smul.addr %s382, 8
        %s384 = scalar_lea.vmem %s0, %s383
        %p385 = pneg %p59
        %p386 = pneg %p56
        %p387 = scmp.lt.s32.totalorder %s30, 1
        %s388 = scalar_select %p387, %s30, 1
        %p389 = scmp.lt.s32.totalorder %s31, 0
        %s390 = scalar_select %p389, %s31, 0
        %s391 = smul.addr %s388, 4
        %s392 = sadd.s32 %s390, %s391
        %s393 = smul.addr %s392, 8
        %s394 = scalar_lea.vmem %s1, %s393
        %p395 = pneg %p87
        %p396 = pneg %p84
        %p397 = pneg %p108
        %p398 = pneg %p105
        %p399 = pneg %p129
        %p400 = pneg %p126
        %p401 = pneg %p150
        %p402 = pneg %p147
        %p403 = pneg %p171
        %p404 = pneg %p168
        %p405 = pneg %p192
        %p406 = pneg %p189
        %p407 = pneg %p213
        %p408 = pneg %p210
        %p409 = pneg %p234
        %p410 = pneg %p231
        %p411 = pneg %p255
        %p412 = pneg %p252
        %p413 = pneg %p283
        %p414 = pneg %p280
        %s415 = sand.u32 %s270, 1
        %s416 = scalar_lea.sflag [#allocation4], %s415
        %s417 = sand.u32 %s270, 1
        %s418 = smul.addr %s417, 32
        %s419 = scalar_lea.vmem [#allocation7], %s418
        %p420 = scmp.lt.s32.totalorder %s30, 1
        %s421 = scalar_select %p420, %s30, 1
        %s422 = smul.addr %s421, 4
        %s423 = smul.addr %s422, 8
        %s424 = scalar_lea.vmem %s0, %s423
        %p425 = scmp.lt.s32.totalorder %s30, 1
        %s426 = scalar_select %p425, %s30, 1
        %p427 = scmp.lt.s32.totalorder %s31, 0
        %s428 = scalar_select %p427, %s31, 0
        %s429 = smul.addr %s426, 4
        %s430 = sadd.s32 %s428, %s429
        %s431 = smul.addr %s430, 8
        %s432 = scalar_lea.vmem %s1, %s431
        %v434 = vld [vmem:[%s424] sm:$0xff]
        %v435 = vld [vmem:[%s424 + $0x8] sm:$0xff]
        %v436 = vld [vmem:[%s424 + $0x10] sm:$0xff]
        %v437 = vld [vmem:[%s424 + $0x18] sm:$0xff]
        %v438 = vld [vmem:[%s432] sm:$0xff]
        %v439 = vld [vmem:[%s432 + $0x8] sm:$0xff]
        %v440 = vld [vmem:[%s432 + $0x10] sm:$0xff]
        %v441 = vld [vmem:[%s432 + $0x18] sm:$0xff]
        %v442 = vld [vmem:[#allocation2] sm:$0xf]
        %v443 = vld [vmem:[#allocation2 + $0x4] sm:$0xf]
        %v444 = vld [vmem:[#allocation2 + $0x8] sm:$0xf]
        %v445 = vld [vmem:[#allocation2 + $0xc] sm:$0xf]
        %v446 = vld [vmem:[%s3] sm:$0xff]
        %v447 = vld [vmem:[%s3 + $0x8] sm:$0xff]
        %v448 = vld [vmem:[%s3 + $0x10] sm:$0xff]
        %v449 = vld [vmem:[%s3 + $0x18] sm:$0xff]
        %v450 = vld [vmem:[%s4] sm:$0xf]
        %v451 = vld [vmem:[%s4 + $0x4] sm:$0xf]
        %v452 = vld [vmem:[%s4 + $0x8] sm:$0xf]
        %v453 = vld [vmem:[%s4 + $0xc] sm:$0xf]
        %v454 = vld [vmem:[%s5] sm:$0xff]
        %v455 = vld [vmem:[%s5 + $0x8] sm:$0xff]
        %v456 = vld [vmem:[%s5 + $0x10] sm:$0xff]
        %v457 = vld [vmem:[%s5 + $0x18] sm:$0xff]
        %v458 = vld [vmem:[#allocation5] sm:$0xf]
        %v459 = vld [vmem:[#allocation5 + $0x4] sm:$0xf]
        %v460 = vld [vmem:[#allocation5 + $0x8] sm:$0xf]
        %v461 = vld [vmem:[#allocation5 + $0xc] sm:$0xf]
        %v462 = vld [vmem:[%s7] sm:$0xff]
        %v463 = vld [vmem:[%s7 + $0x8] sm:$0xff]
        %v464 = vld [vmem:[%s7 + $0x10] sm:$0xff]
        %v465 = vld [vmem:[%s7 + $0x18] sm:$0xff]
        %v466 = vld [vmem:[%s8] sm:$0xf]
        %v467 = vld [vmem:[%s8 + $0x4] sm:$0xf]
        %v468 = vld [vmem:[%s8 + $0x8] sm:$0xf]
        %v469 = vld [vmem:[%s8 + $0xc] sm:$0xf]
        %v470 = vld [vmem:[%s9] sm:$0xff]
        %v471 = vld [vmem:[%s9 + $0x8] sm:$0xff]
        %v472 = vld [vmem:[%s9 + $0x10] sm:$0xff]
        %v473 = vld [vmem:[%s9 + $0x18] sm:$0xff]
        %v474 = vpack.c.bf16 %v435, %v434
        %v475 = vpack.c.bf16 %v437, %v436
        %v476 = vpack.c.bf16 %v439, %v438
        %v477 = vpack.c.bf16 %v441, %v440
        %v478 = vunpack.c.l.bf16 %v474
        %v479 = vunpack.c.h.bf16 %v474
        %v480 = vunpack.c.l.bf16 %v475
        %v481 = vunpack.c.h.bf16 %v475
        %482 = vxpose.xlu0.b32.start [1/16] %v478, 128
        %483 = vxpose.xlu0.b32.cont [2/16] %v479, 128
        %484 = vxpose.xlu0.b32.cont [3/16] %v480, 128
        %485 = vxpose.xlu0.b32.cont [4/16] %v481, 128
        %486 = vxpose.xlu0.b32.cont [5/16] 0.0, 128
        %487 = vxpose.xlu0.b32.cont [6/16] 0.0, 128
        %488 = vxpose.xlu0.b32.cont [7/16] 0.0, 128
        %489 = vxpose.xlu0.b32.cont [8/16] 0.0, 128
        %490 = vxpose.xlu0.b32.cont [9/16] 0.0, 128
        %491 = vxpose.xlu0.b32.cont [10/16] 0.0, 128
        %492 = vxpose.xlu0.b32.cont [11/16] 0.0, 128
        %493 = vxpose.xlu0.b32.cont [12/16] 0.0, 128
        %494 = vxpose.xlu0.b32.cont [13/16] 0.0, 128
        %495 = vxpose.xlu0.b32.cont [14/16] 0.0, 128
        %496 = vxpose.xlu0.b32.cont [15/16] 0.0, 128
        %497 = vxpose.xlu0.b32.end [16/16] 0.0, 128
        %v498 = vpop.trf.xlu0
        %v499 = vpop.trf.xlu0
        %v500 = vpop.trf.xlu0
        %v501 = vpop.trf.xlu0
        %v502 = vpop.trf.xlu0
        %v503 = vpop.trf.xlu0
        %v504 = vpop.trf.xlu0
        %v505 = vpop.trf.xlu0
        %v506 = vpop.trf.xlu0
        %v507 = vpop.trf.xlu0
        %v508 = vpop.trf.xlu0
        %v509 = vpop.trf.xlu0
        %v510 = vpop.trf.xlu0
        %v511 = vpop.trf.xlu0
        %v512 = vpop.trf.xlu0
        %v513 = vpop.trf.xlu0
        %v514 = vmul.f32 %v498, %v498
        %v515 = vmul.f32 %v499, %v499
        %v516 = vmul.f32 %v500, %v500
        %v517 = vmul.f32 %v501, %v501
        %v518 = vmul.f32 %v502, %v502
        %v519 = vmul.f32 %v503, %v503
        %v520 = vmul.f32 %v504, %v504
        %v521 = vmul.f32 %v505, %v505
        %v522 = vmul.f32 %v506, %v506
        %v523 = vmul.f32 %v507, %v507
        %v524 = vmul.f32 %v508, %v508
        %v525 = vmul.f32 %v509, %v509
        %v526 = vmul.f32 %v510, %v510
        %v527 = vmul.f32 %v511, %v511
        %v528 = vmul.f32 %v512, %v512
        %v529 = vmul.f32 %v513, %v513
        %vm530 = vcmask 261120
        %v531 = vsel %vm530, %v514, 0.0
        %532 = vadd.xlane.f32.xlu0 %v531
        %v533 = vpop.xlane.xlu0 %532
        %v534 = vsel %vm530, %v515, 0.0
        %535 = vadd.xlane.f32.xlu0 %v534
        %v536 = vpop.xlane.xlu0 %535
        %v537 = vsel %vm530, %v516, 0.0
        %538 = vadd.xlane.f32.xlu0 %v537
        %v539 = vpop.xlane.xlu0 %538
        %v540 = vsel %vm530, %v517, 0.0
        %541 = vadd.xlane.f32.xlu0 %v540
        %v542 = vpop.xlane.xlu0 %541
        %v543 = vsel %vm530, %v518, 0.0
        %544 = vadd.xlane.f32.xlu0 %v543
        %v545 = vpop.xlane.xlu0 %544
        %v546 = vsel %vm530, %v519, 0.0
        %547 = vadd.xlane.f32.xlu0 %v546
        %v548 = vpop.xlane.xlu0 %547
        %v549 = vsel %vm530, %v520, 0.0
        %550 = vadd.xlane.f32.xlu0 %v549
        %v551 = vpop.xlane.xlu0 %550
        %v552 = vsel %vm530, %v521, 0.0
        %553 = vadd.xlane.f32.xlu0 %v552
        %v554 = vpop.xlane.xlu0 %553
        %v555 = vsel %vm530, %v522, 0.0
        %556 = vadd.xlane.f32.xlu0 %v555
        %v557 = vpop.xlane.xlu0 %556
        %v558 = vsel %vm530, %v523, 0.0
        %559 = vadd.xlane.f32.xlu0 %v558
        %v560 = vpop.xlane.xlu0 %559
        %v561 = vsel %vm530, %v524, 0.0
        %562 = vadd.xlane.f32.xlu0 %v561
        %v563 = vpop.xlane.xlu0 %562
        %v564 = vsel %vm530, %v525, 0.0
        %565 = vadd.xlane.f32.xlu0 %v564
        %v566 = vpop.xlane.xlu0 %565
        %v567 = vsel %vm530, %v526, 0.0
        %568 = vadd.xlane.f32.xlu0 %v567
        %v569 = vpop.xlane.xlu0 %568
        %v570 = vsel %vm530, %v527, 0.0
        %571 = vadd.xlane.f32.xlu0 %v570
        %v572 = vpop.xlane.xlu0 %571
        %v573 = vsel %vm530, %v528, 0.0
        %574 = vadd.xlane.f32.xlu0 %v573
        %v575 = vpop.xlane.xlu0 %574
        %v576 = vsel %vm530, %v529, 0.0
        %577 = vadd.xlane.f32.xlu0 %v576
        %v578 = vpop.xlane.xlu0 %577
        %v579 = vpack.c.bf16 %v499, %v498
        %v580 = vpack.c.bf16 %v501, %v500
        %v581 = vpack.c.bf16 %v503, %v502
        %v582 = vpack.c.bf16 %v505, %v504
        %v583 = vpack.c.bf16 %v507, %v506
        %v584 = vpack.c.bf16 %v509, %v508
        %v585 = vpack.c.bf16 %v511, %v510
        %v586 = vpack.c.bf16 %v513, %v512
        %v588 = vsel %vm530, %v579, 0
        %v591 = vsel %vm530, %v580, 0
        %v594 = vsel %vm530, %v581, 0
        %v597 = vsel %vm530, %v582, 0
        %v600 = vsel %vm530, %v583, 0
        %v603 = vsel %vm530, %v584, 0
        %v606 = vsel %vm530, %v585, 0
        %v609 = vsel %vm530, %v586, 0
        %611 = vmatprep.subr.bf16.mxu0 0
        %612 = vmatpush1.bf16.msra.mxu0 %v476
        %613 = vmatprep.subr.bf16.mxu0 0
        %614 = vmatpush1.bf16.msra.mxu0 %v477
        %615 = vmatprep.subr.bf16.mxu0 0
        %616 = vmatpush1.bf16.msra.mxu0 0
        %617 = vmatprep.subr.bf16.mxu0 0
        %618 = vmatpush1.bf16.msra.mxu0 0
        %619 = vmatprep.subr.bf16.mxu0 0
        %620 = vmatpush1.bf16.msra.mxu0 0
        %621 = vmatprep.subr.bf16.mxu0 0
        %622 = vmatpush1.bf16.msra.mxu0 0
        %623 = vmatprep.subr.bf16.mxu0 0
        %624 = vmatpush1.bf16.msra.mxu0 0
        %625 = vmatprep.subr.bf16.mxu0 0
        %626 = vmatpush1.bf16.msra.mxu0 0
        %627 = vmatprep.subr.bf16.mxu0 0
        %628 = vmatpush1.bf16.msra.mxu0 0
        %629 = vmatprep.subr.bf16.mxu0 0
        %630 = vmatpush1.bf16.msra.mxu0 0
        %631 = vmatprep.subr.bf16.mxu0 0
        %632 = vmatpush1.bf16.msra.mxu0 0
        %633 = vmatprep.subr.bf16.mxu0 0
        %634 = vmatpush1.bf16.msra.mxu0 0
        %635 = vmatprep.subr.bf16.mxu0 0
        %636 = vmatpush1.bf16.msra.mxu0 0
        %637 = vmatprep.subr.bf16.mxu0 0
        %638 = vmatpush1.bf16.msra.mxu0 0
        %639 = vmatprep.subr.bf16.mxu0 0
        %640 = vmatpush1.bf16.msra.mxu0 0
        %641 = vmatprep.subr.bf16.mxu0 0
        %642 = vmatpush1.bf16.msra.mxu0 0
        %643 = vmatprep.mubr.bf16.mxu0 0
        %644 = vmatmul.mubr.bf16.gmra.mrb[0].mxu0 %v588
        %v645 = vpop.f32.mrb[0].mxu0
        %v646 = vadd.f32 0.0, %v645
        %v647 = vpop.f32.mrb[0].mxu0
        %v648 = vpop.f32.mrb[0].mxu0
        %v649 = vadd.f32 0.0, %v648
        %v650 = vpop.f32.mrb[0].mxu0
        %651 = vmatprep.mubr.bf16.mxu0 0
        %652 = vmatmul.mubr.bf16.gmra.mrb[0].mxu0 %v591
        %v653 = vpop.f32.mrb[0].mxu0
        %v654 = vadd.f32 0.0, %v653
        %v655 = vpop.f32.mrb[0].mxu0
        %v656 = vpop.f32.mrb[0].mxu0
        %v657 = vadd.f32 0.0, %v656
        %v658 = vpop.f32.mrb[0].mxu0
        %659 = vmatprep.mubr.bf16.mxu0 0
        %660 = vmatmul.mubr.bf16.gmra.mrb[0].mxu0 %v594
        %v661 = vpop.f32.mrb[0].mxu0
        %v662 = vadd.f32 0.0, %v661
        %v663 = vpop.f32.mrb[0].mxu0
        %v664 = vpop.f32.mrb[0].mxu0
        %v665 = vadd.f32 0.0, %v664
        %v666 = vpop.f32.mrb[0].mxu0
        %667 = vmatprep.mubr.bf16.mxu0 0
        %668 = vmatmul.mubr.bf16.gmra.mrb[0].mxu0 %v597
        %v669 = vpop.f32.mrb[0].mxu0
        %v670 = vadd.f32 0.0, %v669
        %v671 = vpop.f32.mrb[0].mxu0
        %v672 = vpop.f32.mrb[0].mxu0
        %v673 = vadd.f32 0.0, %v672
        %v674 = vpop.f32.mrb[0].mxu0
        %675 = vmatprep.mubr.bf16.mxu0 0
        %676 = vmatmul.mubr.bf16.gmra.mrb[0].mxu0 %v600
        %v677 = vpop.f32.mrb[0].mxu0
        %v678 = vadd.f32 0.0, %v677
        %v679 = vpop.f32.mrb[0].mxu0
        %v680 = vpop.f32.mrb[0].mxu0
        %v681 = vadd.f32 0.0, %v680
        %v682 = vpop.f32.mrb[0].mxu0
        %683 = vmatprep.mubr.bf16.mxu0 0
        %684 = vmatmul.mubr.bf16.gmra.mrb[0].mxu0 %v603
        %v685 = vpop.f32.mrb[0].mxu0
        %v686 = vadd.f32 0.0, %v685
        %v687 = vpop.f32.mrb[0].mxu0
        %v688 = vpop.f32.mrb[0].mxu0
        %v689 = vadd.f32 0.0, %v688
        %v690 = vpop.f32.mrb[0].mxu0
        %691 = vmatprep.mubr.bf16.mxu0 0
        %692 = vmatmul.mubr.bf16.gmra.mrb[0].mxu0 %v606
        %v693 = vpop.f32.mrb[0].mxu0
        %v694 = vadd.f32 0.0, %v693
        %v695 = vpop.f32.mrb[0].mxu0
        %v696 = vpop.f32.mrb[0].mxu0
        %v697 = vadd.f32 0.0, %v696
        %v698 = vpop.f32.mrb[0].mxu0
        %699 = vmatprep.mubr.bf16.mxu0 0
        %700 = vmatmul.mubr.bf16.gmra.mrb[0].mxu0 %v609
        %v701 = vpop.f32.mrb[0].mxu0
        %v702 = vadd.f32 0.0, %v701
        %v703 = vpop.f32.mrb[0].mxu0
        %v704 = vpop.f32.mrb[0].mxu0
        %v705 = vadd.f32 0.0, %v704
        %v706 = vpop.f32.mrb[0].mxu0
        %707 = vdwg.mxu0
        %v708 = vmul.f32 %v646, 2.0
        %v709 = vmul.f32 %v649, 2.0
        %v710 = vmul.f32 %v654, 2.0
        %v711 = vmul.f32 %v657, 2.0
        %v712 = vmul.f32 %v662, 2.0
        %v713 = vmul.f32 %v665, 2.0
        %v714 = vmul.f32 %v670, 2.0
        %v715 = vmul.f32 %v673, 2.0
        %v716 = vmul.f32 %v678, 2.0
        %v717 = vmul.f32 %v681, 2.0
        %v718 = vmul.f32 %v686, 2.0
        %v719 = vmul.f32 %v689, 2.0
        %v720 = vmul.f32 %v694, 2.0
        %v721 = vmul.f32 %v697, 2.0
        %v722 = vmul.f32 %v702, 2.0
        %v723 = vmul.f32 %v705, 2.0
        %v724 = vsub.f32 %v708, %v533
        %v725 = vsub.f32 %v709, %v536
        %v726 = vsub.f32 %v710, %v539
        %v727 = vsub.f32 %v711, %v542
        %v728 = vsub.f32 %v712, %v545
        %v729 = vsub.f32 %v713, %v548
        %v730 = vsub.f32 %v714, %v551
        %v731 = vsub.f32 %v715, %v554
        %v732 = vsub.f32 %v716, %v557
        %v733 = vsub.f32 %v717, %v560
        %v734 = vsub.f32 %v718, %v563
        %v735 = vsub.f32 %v719, %v566
        %v736 = vsub.f32 %v720, %v569
        %v737 = vsub.f32 %v721, %v572
        %v738 = vsub.f32 %v722, %v575
        %v739 = vsub.f32 %v723, %v578
        %v740 = vlaneseq
        %v741 = vshrl.u32 %v740, 7
        %v742 = vadd.s32 %v741, 8
        %v743 = vadd.s32 %v741, 16
        %v744 = vadd.s32 %v741, 24
        %v745 = vadd.s32 %v741, 32
        %v746 = vadd.s32 %v741, 40
        %v747 = vadd.s32 %v741, 48
        %v748 = vadd.s32 %v741, 56
        %v749 = vadd.s32 %v741, 64
        %v750 = vadd.s32 %v741, 72
        %v751 = vadd.s32 %v741, 80
        %v752 = vadd.s32 %v741, 88
        %v753 = vadd.s32 %v741, 96
        %v754 = vadd.s32 %v741, 104
        %v755 = vadd.s32 %v741, 112
        %v756 = vadd.s32 %v741, 120
        %vm757 = vcmp.lt.s32.totalorder %v741, 16
        %vm758 = vcmp.lt.s32.totalorder %v742, 16
        %vm759 = vcmp.lt.s32.totalorder %v743, 16
        %vm760 = vcmp.lt.s32.totalorder %v744, 16
        %vm761 = vcmp.lt.s32.totalorder %v745, 16
        %vm762 = vcmp.lt.s32.totalorder %v746, 16
        %vm763 = vcmp.lt.s32.totalorder %v747, 16
        %vm764 = vcmp.lt.s32.totalorder %v748, 16
        %vm765 = vcmp.lt.s32.totalorder %v749, 16
        %vm766 = vcmp.lt.s32.totalorder %v750, 16
        %vm767 = vcmp.lt.s32.totalorder %v751, 16
        %vm768 = vcmp.lt.s32.totalorder %v752, 16
        %vm769 = vcmp.lt.s32.totalorder %v753, 16
        %vm770 = vcmp.lt.s32.totalorder %v754, 16
        %vm771 = vcmp.lt.s32.totalorder %v755, 16
        %vm772 = vcmp.lt.s32.totalorder %v756, 16
        %v773 = vsel %vm757, %v724, -1e+30
        %v774 = vsel %vm758, %v725, -1e+30
        %v775 = vsel %vm759, %v726, -1e+30
        %v776 = vsel %vm760, %v727, -1e+30
        %v777 = vsel %vm761, %v728, -1e+30
        %v778 = vsel %vm762, %v729, -1e+30
        %v779 = vsel %vm763, %v730, -1e+30
        %v780 = vsel %vm764, %v731, -1e+30
        %v781 = vsel %vm765, %v732, -1e+30
        %v782 = vsel %vm766, %v733, -1e+30
        %v783 = vsel %vm767, %v734, -1e+30
        %v784 = vsel %vm768, %v735, -1e+30
        %v785 = vsel %vm769, %v736, -1e+30
        %v786 = vsel %vm770, %v737, -1e+30
        %v787 = vsel %vm771, %v738, -1e+30
        %v788 = vsel %vm772, %v739, -1e+30
        %v789 = vmax.f32 %v773, %v777
        %v790 = vmax.f32 %v774, %v778
        %v791 = vmax.f32 %v775, %v779
        %v792 = vmax.f32 %v776, %v780
        %v793 = vmax.f32 %v789, %v781
        %v794 = vmax.f32 %v790, %v782
        %v795 = vmax.f32 %v791, %v783
        %v796 = vmax.f32 %v792, %v784
        %v797 = vmax.f32 %v793, %v785
        %v798 = vmax.f32 %v794, %v786
        %v799 = vmax.f32 %v795, %v787
        %v800 = vmax.f32 %v796, %v788
        %v801 = vmax.f32 %v797, %v798
        %v802 = vmax.f32 %v799, %v800
        %v803 = vmax.f32 %v801, %v802
        %v804 = vrot.slane %v803, 4
        %v805 = vmax.f32 %v803, %v804
        %v806 = vrot.slane %v805, 2
        %v807 = vmax.f32 %v805, %v806
        %v808 = vrot.slane %v807, 1
        %v809 = vmax.f32 %v807, %v808
        %vm810 = vcmp.eq.f32.partialorder %v773, %v809
        %vm811 = vcmp.eq.f32.partialorder %v774, %v809
        %vm812 = vcmp.eq.f32.partialorder %v775, %v809
        %vm813 = vcmp.eq.f32.partialorder %v776, %v809
        %vm814 = vcmp.eq.f32.partialorder %v777, %v809
        %vm815 = vcmp.eq.f32.partialorder %v778, %v809
        %vm816 = vcmp.eq.f32.partialorder %v779, %v809
        %vm817 = vcmp.eq.f32.partialorder %v780, %v809
        %vm818 = vcmp.eq.f32.partialorder %v781, %v809
        %vm819 = vcmp.eq.f32.partialorder %v782, %v809
        %vm820 = vcmp.eq.f32.partialorder %v783, %v809
        %vm821 = vcmp.eq.f32.partialorder %v784, %v809
        %vm822 = vcmp.eq.f32.partialorder %v785, %v809
        %vm823 = vcmp.eq.f32.partialorder %v786, %v809
        %vm824 = vcmp.eq.f32.partialorder %v787, %v809
        %vm825 = vcmp.eq.f32.partialorder %v788, %v809
        %v826 = vsel %vm810, %v741, 128
        %v827 = vsel %vm811, %v742, 128
        %v828 = vsel %vm812, %v743, 128
        %v829 = vsel %vm813, %v744, 128
        %v830 = vsel %vm814, %v745, 128
        %v831 = vsel %vm815, %v746, 128
        %v832 = vsel %vm816, %v747, 128
        %v833 = vsel %vm817, %v748, 128
        %v834 = vsel %vm818, %v749, 128
        %v835 = vsel %vm819, %v750, 128
        %v836 = vsel %vm820, %v751, 128
        %v837 = vsel %vm821, %v752, 128
        %v838 = vsel %vm822, %v753, 128
        %v839 = vsel %vm823, %v754, 128
        %v840 = vsel %vm824, %v755, 128
        %v841 = vsel %vm825, %v756, 128
        %vm842 = vcmp.lt.s32.totalorder %v826, %v830
        %v843 = vsel %vm842, %v826, %v830
        %vm844 = vcmp.lt.s32.totalorder %v827, %v831
        %v845 = vsel %vm844, %v827, %v831
        %vm846 = vcmp.lt.s32.totalorder %v828, %v832
        %v847 = vsel %vm846, %v828, %v832
        %vm848 = vcmp.lt.s32.totalorder %v829, %v833
        %v849 = vsel %vm848, %v829, %v833
        %vm850 = vcmp.lt.s32.totalorder %v843, %v834
        %v851 = vsel %vm850, %v843, %v834
        %vm852 = vcmp.lt.s32.totalorder %v845, %v835
        %v853 = vsel %vm852, %v845, %v835
        %vm854 = vcmp.lt.s32.totalorder %v847, %v836
        %v855 = vsel %vm854, %v847, %v836
        %vm856 = vcmp.lt.s32.totalorder %v849, %v837
        %v857 = vsel %vm856, %v849, %v837
        %vm858 = vcmp.lt.s32.totalorder %v851, %v838
        %v859 = vsel %vm858, %v851, %v838
        %vm860 = vcmp.lt.s32.totalorder %v853, %v839
        %v861 = vsel %vm860, %v853, %v839
        %vm862 = vcmp.lt.s32.totalorder %v855, %v840
        %v863 = vsel %vm862, %v855, %v840
        %vm864 = vcmp.lt.s32.totalorder %v857, %v841
        %v865 = vsel %vm864, %v857, %v841
        %vm866 = vcmp.lt.s32.totalorder %v859, %v861
        %v867 = vsel %vm866, %v859, %v861
        %vm868 = vcmp.lt.s32.totalorder %v863, %v865
        %v869 = vsel %vm868, %v863, %v865
        %vm870 = vcmp.lt.s32.totalorder %v867, %v869
        %v871 = vsel %vm870, %v867, %v869
        %v872 = vrot.slane %v871, 4
        %vm873 = vcmp.lt.s32.totalorder %v871, %v872
        %v874 = vsel %vm873, %v871, %v872
        %v875 = vrot.slane %v874, 2
        %vm876 = vcmp.lt.s32.totalorder %v874, %v875
        %v877 = vsel %vm876, %v874, %v875
        %v878 = vrot.slane %v877, 1
        %vm879 = vcmp.lt.s32.totalorder %v877, %v878
        %v880 = vsel %vm879, %v877, %v878
        %vm881 = vcmp.eq.s32.totalorder %v741, %v880
        %vm882 = vcmp.eq.s32.totalorder %v742, %v880
        %vm883 = vcmp.eq.s32.totalorder %v743, %v880
        %vm884 = vcmp.eq.s32.totalorder %v744, %v880
        %vm885 = vcmp.eq.s32.totalorder %v745, %v880
        %vm886 = vcmp.eq.s32.totalorder %v746, %v880
        %vm887 = vcmp.eq.s32.totalorder %v747, %v880
        %vm888 = vcmp.eq.s32.totalorder %v748, %v880
        %vm889 = vcmp.eq.s32.totalorder %v749, %v880
        %vm890 = vcmp.eq.s32.totalorder %v750, %v880
        %vm891 = vcmp.eq.s32.totalorder %v751, %v880
        %vm892 = vcmp.eq.s32.totalorder %v752, %v880
        %vm893 = vcmp.eq.s32.totalorder %v753, %v880
        %vm894 = vcmp.eq.s32.totalorder %v754, %v880
        %vm895 = vcmp.eq.s32.totalorder %v755, %v880
        %vm896 = vcmp.eq.s32.totalorder %v756, %v880
        %v897 = vsel %vm881, 1, 0
        %v898 = vsel %vm882, 1, 0
        %v899 = vsel %vm883, 1, 0
        %v900 = vsel %vm884, 1, 0
        %v901 = vsel %vm885, 1, 0
        %v902 = vsel %vm886, 1, 0
        %v903 = vsel %vm887, 1, 0
        %v904 = vsel %vm888, 1, 0
        %v905 = vsel %vm889, 1, 0
        %v906 = vsel %vm890, 1, 0
        %v907 = vsel %vm891, 1, 0
        %v908 = vsel %vm892, 1, 0
        %v909 = vsel %vm893, 1, 0
        %v910 = vsel %vm894, 1, 0
        %v911 = vsel %vm895, 1, 0
        %v912 = vsel %vm896, 1, 0
        %v913 = vcvt.s32.f32 %v897
        %v914 = vcvt.s32.f32 %v898
        %v915 = vcvt.s32.f32 %v899
        %v916 = vcvt.s32.f32 %v900
        %v917 = vcvt.s32.f32 %v901
        %v918 = vcvt.s32.f32 %v902
        %v919 = vcvt.s32.f32 %v903
        %v920 = vcvt.s32.f32 %v904
        %v921 = vcvt.s32.f32 %v905
        %v922 = vcvt.s32.f32 %v906
        %v923 = vcvt.s32.f32 %v907
        %v924 = vcvt.s32.f32 %v908
        %v925 = vcvt.s32.f32 %v909
        %v926 = vcvt.s32.f32 %v910
        %v927 = vcvt.s32.f32 %v911
        %v928 = vcvt.s32.f32 %v912
        %v929 = vpack.c.bf16 %v914, %v913
        %v930 = vpack.c.bf16 %v916, %v915
        %v931 = vpack.c.bf16 %v918, %v917
        %v932 = vpack.c.bf16 %v920, %v919
        %v933 = vpack.c.bf16 %v922, %v921
        %v934 = vpack.c.bf16 %v924, %v923
        %v935 = vpack.c.bf16 %v926, %v925
        %v936 = vpack.c.bf16 %v928, %v927
        %v937 = vsel %vm881, -1e+30, %v773
        %v938 = vsel %vm882, -1e+30, %v774
        %v939 = vsel %vm883, -1e+30, %v775
        %v940 = vsel %vm884, -1e+30, %v776
        %v941 = vsel %vm885, -1e+30, %v777
        %v942 = vsel %vm886, -1e+30, %v778
        %v943 = vsel %vm887, -1e+30, %v779
        %v944 = vsel %vm888, -1e+30, %v780
        %v945 = vsel %vm889, -1e+30, %v781
        %v946 = vsel %vm890, -1e+30, %v782
        %v947 = vsel %vm891, -1e+30, %v783
        %v948 = vsel %vm892, -1e+30, %v784
        %v949 = vsel %vm893, -1e+30, %v785
        %v950 = vsel %vm894, -1e+30, %v786
        %v951 = vsel %vm895, -1e+30, %v787
        %v952 = vsel %vm896, -1e+30, %v788
        %v953 = vmax.f32 %v937, %v941
        %v954 = vmax.f32 %v938, %v942
        %v955 = vmax.f32 %v939, %v943
        %v956 = vmax.f32 %v940, %v944
        %v957 = vmax.f32 %v953, %v945
        %v958 = vmax.f32 %v954, %v946
        %v959 = vmax.f32 %v955, %v947
        %v960 = vmax.f32 %v956, %v948
        %v961 = vmax.f32 %v957, %v949
        %v962 = vmax.f32 %v958, %v950
        %v963 = vmax.f32 %v959, %v951
        %v964 = vmax.f32 %v960, %v952
        %v965 = vmax.f32 %v961, %v962
        %v966 = vmax.f32 %v963, %v964
        %v967 = vmax.f32 %v965, %v966
        %v968 = vrot.slane %v967, 4
        %v969 = vmax.f32 %v967, %v968
        %v970 = vrot.slane %v969, 2
        %v971 = vmax.f32 %v969, %v970
        %v972 = vrot.slane %v971, 1
        %v973 = vmax.f32 %v971, %v972
        %vm974 = vcmp.eq.f32.partialorder %v937, %v973
        %vm975 = vcmp.eq.f32.partialorder %v938, %v973
        %vm976 = vcmp.eq.f32.partialorder %v939, %v973
        %vm977 = vcmp.eq.f32.partialorder %v940, %v973
        %vm978 = vcmp.eq.f32.partialorder %v941, %v973
        %vm979 = vcmp.eq.f32.partialorder %v942, %v973
        %vm980 = vcmp.eq.f32.partialorder %v943, %v973
        %vm981 = vcmp.eq.f32.partialorder %v944, %v973
        %vm982 = vcmp.eq.f32.partialorder %v945, %v973
        %vm983 = vcmp.eq.f32.partialorder %v946, %v973
        %vm984 = vcmp.eq.f32.partialorder %v947, %v973
        %vm985 = vcmp.eq.f32.partialorder %v948, %v973
        %vm986 = vcmp.eq.f32.partialorder %v949, %v973
        %vm987 = vcmp.eq.f32.partialorder %v950, %v973
        %vm988 = vcmp.eq.f32.partialorder %v951, %v973
        %vm989 = vcmp.eq.f32.partialorder %v952, %v973
        %v990 = vsel %vm974, %v741, 128
        %v991 = vsel %vm975, %v742, 128
        %v992 = vsel %vm976, %v743, 128
        %v993 = vsel %vm977, %v744, 128
        %v994 = vsel %vm978, %v745, 128
        %v995 = vsel %vm979, %v746, 128
        %v996 = vsel %vm980, %v747, 128
        %v997 = vsel %vm981, %v748, 128
        %v998 = vsel %vm982, %v749, 128
        %v999 = vsel %vm983, %v750, 128
        %v1000 = vsel %vm984, %v751, 128
        %v1001 = vsel %vm985, %v752, 128
        %v1002 = vsel %vm986, %v753, 128
        %v1003 = vsel %vm987, %v754, 128
        %v1004 = vsel %vm988, %v755, 128
        %v1005 = vsel %vm989, %v756, 128
        %vm1006 = vcmp.lt.s32.totalorder %v990, %v994
        %v1007 = vsel %vm1006, %v990, %v994
        %vm1008 = vcmp.lt.s32.totalorder %v991, %v995
        %v1009 = vsel %vm1008, %v991, %v995
        %vm1010 = vcmp.lt.s32.totalorder %v992, %v996
        %v1011 = vsel %vm1010, %v992, %v996
        %vm1012 = vcmp.lt.s32.totalorder %v993, %v997
        %v1013 = vsel %vm1012, %v993, %v997
        %vm1014 = vcmp.lt.s32.totalorder %v1007, %v998
        %v1015 = vsel %vm1014, %v1007, %v998
        %vm1016 = vcmp.lt.s32.totalorder %v1009, %v999
        %v1017 = vsel %vm1016, %v1009, %v999
        %vm1018 = vcmp.lt.s32.totalorder %v1011, %v1000
        %v1019 = vsel %vm1018, %v1011, %v1000
        %vm1020 = vcmp.lt.s32.totalorder %v1013, %v1001
        %v1021 = vsel %vm1020, %v1013, %v1001
        %vm1022 = vcmp.lt.s32.totalorder %v1015, %v1002
        %v1023 = vsel %vm1022, %v1015, %v1002
        %vm1024 = vcmp.lt.s32.totalorder %v1017, %v1003
        %v1025 = vsel %vm1024, %v1017, %v1003
        %vm1026 = vcmp.lt.s32.totalorder %v1019, %v1004
        %v1027 = vsel %vm1026, %v1019, %v1004
        %vm1028 = vcmp.lt.s32.totalorder %v1021, %v1005
        %v1029 = vsel %vm1028, %v1021, %v1005
        %vm1030 = vcmp.lt.s32.totalorder %v1023, %v1025
        %v1031 = vsel %vm1030, %v1023, %v1025
        %vm1032 = vcmp.lt.s32.totalorder %v1027, %v1029
        %v1033 = vsel %vm1032, %v1027, %v1029
        %vm1034 = vcmp.lt.s32.totalorder %v1031, %v1033
        %v1035 = vsel %vm1034, %v1031, %v1033
        %v1036 = vrot.slane %v1035, 4
        %vm1037 = vcmp.lt.s32.totalorder %v1035, %v1036
        %v1038 = vsel %vm1037, %v1035, %v1036
        %v1039 = vrot.slane %v1038, 2
        %vm1040 = vcmp.lt.s32.totalorder %v1038, %v1039
        %v1041 = vsel %vm1040, %v1038, %v1039
        %v1042 = vrot.slane %v1041, 1
        %vm1043 = vcmp.lt.s32.totalorder %v1041, %v1042
        %v1044 = vsel %vm1043, %v1041, %v1042
        %vm1045 = vcmp.eq.s32.totalorder %v741, %v1044
        %vm1046 = vcmp.eq.s32.totalorder %v742, %v1044
        %vm1047 = vcmp.eq.s32.totalorder %v743, %v1044
        %vm1048 = vcmp.eq.s32.totalorder %v744, %v1044
        %vm1049 = vcmp.eq.s32.totalorder %v745, %v1044
        %vm1050 = vcmp.eq.s32.totalorder %v746, %v1044
        %vm1051 = vcmp.eq.s32.totalorder %v747, %v1044
        %vm1052 = vcmp.eq.s32.totalorder %v748, %v1044
        %vm1053 = vcmp.eq.s32.totalorder %v749, %v1044
        %vm1054 = vcmp.eq.s32.totalorder %v750, %v1044
        %vm1055 = vcmp.eq.s32.totalorder %v751, %v1044
        %vm1056 = vcmp.eq.s32.totalorder %v752, %v1044
        %vm1057 = vcmp.eq.s32.totalorder %v753, %v1044
        %vm1058 = vcmp.eq.s32.totalorder %v754, %v1044
        %vm1059 = vcmp.eq.s32.totalorder %v755, %v1044
        %vm1060 = vcmp.eq.s32.totalorder %v756, %v1044
        %v1061 = vsel %vm1045, 1, 0
        %v1062 = vsel %vm1046, 1, 0
        %v1063 = vsel %vm1047, 1, 0
        %v1064 = vsel %vm1048, 1, 0
        %v1065 = vsel %vm1049, 1, 0
        %v1066 = vsel %vm1050, 1, 0
        %v1067 = vsel %vm1051, 1, 0
        %v1068 = vsel %vm1052, 1, 0
        %v1069 = vsel %vm1053, 1, 0
        %v1070 = vsel %vm1054, 1, 0
        %v1071 = vsel %vm1055, 1, 0
        %v1072 = vsel %vm1056, 1, 0
        %v1073 = vsel %vm1057, 1, 0
        %v1074 = vsel %vm1058, 1, 0
        %v1075 = vsel %vm1059, 1, 0
        %v1076 = vsel %vm1060, 1, 0
        %v1077 = vcvt.s32.f32 %v1061
        %v1078 = vcvt.s32.f32 %v1062
        %v1079 = vcvt.s32.f32 %v1063
        %v1080 = vcvt.s32.f32 %v1064
        %v1081 = vcvt.s32.f32 %v1065
        %v1082 = vcvt.s32.f32 %v1066
        %v1083 = vcvt.s32.f32 %v1067
        %v1084 = vcvt.s32.f32 %v1068
        %v1085 = vcvt.s32.f32 %v1069
        %v1086 = vcvt.s32.f32 %v1070
        %v1087 = vcvt.s32.f32 %v1071
        %v1088 = vcvt.s32.f32 %v1072
        %v1089 = vcvt.s32.f32 %v1073
        %v1090 = vcvt.s32.f32 %v1074
        %v1091 = vcvt.s32.f32 %v1075
        %v1092 = vcvt.s32.f32 %v1076
        %v1093 = vpack.c.bf16 %v1078, %v1077
        %v1094 = vpack.c.bf16 %v1080, %v1079
        %v1095 = vpack.c.bf16 %v1082, %v1081
        %v1096 = vpack.c.bf16 %v1084, %v1083
        %v1097 = vpack.c.bf16 %v1086, %v1085
        %v1098 = vpack.c.bf16 %v1088, %v1087
        %v1099 = vpack.c.bf16 %v1090, %v1089
        %v1100 = vpack.c.bf16 %v1092, %v1091
        %v1101 = vsel %vm1045, -1e+30, %v937
        %v1102 = vsel %vm1046, -1e+30, %v938
        %v1103 = vsel %vm1047, -1e+30, %v939
        %v1104 = vsel %vm1048, -1e+30, %v940
        %v1105 = vsel %vm1049, -1e+30, %v941
        %v1106 = vsel %vm1050, -1e+30, %v942
        %v1107 = vsel %vm1051, -1e+30, %v943
        %v1108 = vsel %vm1052, -1e+30, %v944
        %v1109 = vsel %vm1053, -1e+30, %v945
        %v1110 = vsel %vm1054, -1e+30, %v946
        %v1111 = vsel %vm1055, -1e+30, %v947
        %v1112 = vsel %vm1056, -1e+30, %v948
        %v1113 = vsel %vm1057, -1e+30, %v949
        %v1114 = vsel %vm1058, -1e+30, %v950
        %v1115 = vsel %vm1059, -1e+30, %v951
        %v1116 = vsel %vm1060, -1e+30, %v952
        %v1117 = vmax.f32 %v1101, %v1105
        %v1118 = vmax.f32 %v1102, %v1106
        %v1119 = vmax.f32 %v1103, %v1107
        %v1120 = vmax.f32 %v1104, %v1108
        %v1121 = vmax.f32 %v1117, %v1109
        %v1122 = vmax.f32 %v1118, %v1110
        %v1123 = vmax.f32 %v1119, %v1111
        %v1124 = vmax.f32 %v1120, %v1112
        %v1125 = vmax.f32 %v1121, %v1113
        %v1126 = vmax.f32 %v1122, %v1114
        %v1127 = vmax.f32 %v1123, %v1115
        %v1128 = vmax.f32 %v1124, %v1116
        %v1129 = vmax.f32 %v1125, %v1126
        %v1130 = vmax.f32 %v1127, %v1128
        %v1131 = vmax.f32 %v1129, %v1130
        %v1132 = vrot.slane %v1131, 4
        %v1133 = vmax.f32 %v1131, %v1132
        %v1134 = vrot.slane %v1133, 2
        %v1135 = vmax.f32 %v1133, %v1134
        %v1136 = vrot.slane %v1135, 1
        %v1137 = vmax.f32 %v1135, %v1136
        %vm1138 = vcmp.eq.f32.partialorder %v1101, %v1137
        %vm1139 = vcmp.eq.f32.partialorder %v1102, %v1137
        %vm1140 = vcmp.eq.f32.partialorder %v1103, %v1137
        %vm1141 = vcmp.eq.f32.partialorder %v1104, %v1137
        %vm1142 = vcmp.eq.f32.partialorder %v1105, %v1137
        %vm1143 = vcmp.eq.f32.partialorder %v1106, %v1137
        %vm1144 = vcmp.eq.f32.partialorder %v1107, %v1137
        %vm1145 = vcmp.eq.f32.partialorder %v1108, %v1137
        %vm1146 = vcmp.eq.f32.partialorder %v1109, %v1137
        %vm1147 = vcmp.eq.f32.partialorder %v1110, %v1137
        %vm1148 = vcmp.eq.f32.partialorder %v1111, %v1137
        %vm1149 = vcmp.eq.f32.partialorder %v1112, %v1137
        %vm1150 = vcmp.eq.f32.partialorder %v1113, %v1137
        %vm1151 = vcmp.eq.f32.partialorder %v1114, %v1137
        %vm1152 = vcmp.eq.f32.partialorder %v1115, %v1137
        %vm1153 = vcmp.eq.f32.partialorder %v1116, %v1137
        %v1154 = vsel %vm1138, %v741, 128
        %v1155 = vsel %vm1139, %v742, 128
        %v1156 = vsel %vm1140, %v743, 128
        %v1157 = vsel %vm1141, %v744, 128
        %v1158 = vsel %vm1142, %v745, 128
        %v1159 = vsel %vm1143, %v746, 128
        %v1160 = vsel %vm1144, %v747, 128
        %v1161 = vsel %vm1145, %v748, 128
        %v1162 = vsel %vm1146, %v749, 128
        %v1163 = vsel %vm1147, %v750, 128
        %v1164 = vsel %vm1148, %v751, 128
        %v1165 = vsel %vm1149, %v752, 128
        %v1166 = vsel %vm1150, %v753, 128
        %v1167 = vsel %vm1151, %v754, 128
        %v1168 = vsel %vm1152, %v755, 128
        %v1169 = vsel %vm1153, %v756, 128
        %vm1170 = vcmp.lt.s32.totalorder %v1154, %v1158
        %v1171 = vsel %vm1170, %v1154, %v1158
        %vm1172 = vcmp.lt.s32.totalorder %v1155, %v1159
        %v1173 = vsel %vm1172, %v1155, %v1159
        %vm1174 = vcmp.lt.s32.totalorder %v1156, %v1160
        %v1175 = vsel %vm1174, %v1156, %v1160
        %vm1176 = vcmp.lt.s32.totalorder %v1157, %v1161
        %v1177 = vsel %vm1176, %v1157, %v1161
        %vm1178 = vcmp.lt.s32.totalorder %v1171, %v1162
        %v1179 = vsel %vm1178, %v1171, %v1162
        %vm1180 = vcmp.lt.s32.totalorder %v1173, %v1163
        %v1181 = vsel %vm1180, %v1173, %v1163
        %vm1182 = vcmp.lt.s32.totalorder %v1175, %v1164
        %v1183 = vsel %vm1182, %v1175, %v1164
        %vm1184 = vcmp.lt.s32.totalorder %v1177, %v1165
        %v1185 = vsel %vm1184, %v1177, %v1165
        %vm1186 = vcmp.lt.s32.totalorder %v1179, %v1166
        %v1187 = vsel %vm1186, %v1179, %v1166
        %vm1188 = vcmp.lt.s32.totalorder %v1181, %v1167
        %v1189 = vsel %vm1188, %v1181, %v1167
        %vm1190 = vcmp.lt.s32.totalorder %v1183, %v1168
        %v1191 = vsel %vm1190, %v1183, %v1168
        %vm1192 = vcmp.lt.s32.totalorder %v1185, %v1169
        %v1193 = vsel %vm1192, %v1185, %v1169
        %vm1194 = vcmp.lt.s32.totalorder %v1187, %v1189
        %v1195 = vsel %vm1194, %v1187, %v1189
        %vm1196 = vcmp.lt.s32.totalorder %v1191, %v1193
        %v1197 = vsel %vm1196, %v1191, %v1193
        %vm1198 = vcmp.lt.s32.totalorder %v1195, %v1197
        %v1199 = vsel %vm1198, %v1195, %v1197
        %v1200 = vrot.slane %v1199, 4
        %vm1201 = vcmp.lt.s32.totalorder %v1199, %v1200
        %v1202 = vsel %vm1201, %v1199, %v1200
        %v1203 = vrot.slane %v1202, 2
        %vm1204 = vcmp.lt.s32.totalorder %v1202, %v1203
        %v1205 = vsel %vm1204, %v1202, %v1203
        %v1206 = vrot.slane %v1205, 1
        %vm1207 = vcmp.lt.s32.totalorder %v1205, %v1206
        %v1208 = vsel %vm1207, %v1205, %v1206
        %vm1209 = vcmp.eq.s32.totalorder %v741, %v1208
        %vm1210 = vcmp.eq.s32.totalorder %v742, %v1208
        %vm1211 = vcmp.eq.s32.totalorder %v743, %v1208
        %vm1212 = vcmp.eq.s32.totalorder %v744, %v1208
        %vm1213 = vcmp.eq.s32.totalorder %v745, %v1208
        %vm1214 = vcmp.eq.s32.totalorder %v746, %v1208
        %vm1215 = vcmp.eq.s32.totalorder %v747, %v1208
        %vm1216 = vcmp.eq.s32.totalorder %v748, %v1208
        %vm1217 = vcmp.eq.s32.totalorder %v749, %v1208
        %vm1218 = vcmp.eq.s32.totalorder %v750, %v1208
        %vm1219 = vcmp.eq.s32.totalorder %v751, %v1208
        %vm1220 = vcmp.eq.s32.totalorder %v752, %v1208
        %vm1221 = vcmp.eq.s32.totalorder %v753, %v1208
        %vm1222 = vcmp.eq.s32.totalorder %v754, %v1208
        %vm1223 = vcmp.eq.s32.totalorder %v755, %v1208
        %vm1224 = vcmp.eq.s32.totalorder %v756, %v1208
        %v1225 = vsel %vm1209, 1, 0
        %v1226 = vsel %vm1210, 1, 0
        %v1227 = vsel %vm1211, 1, 0
        %v1228 = vsel %vm1212, 1, 0
        %v1229 = vsel %vm1213, 1, 0
        %v1230 = vsel %vm1214, 1, 0
        %v1231 = vsel %vm1215, 1, 0
        %v1232 = vsel %vm1216, 1, 0
        %v1233 = vsel %vm1217, 1, 0
        %v1234 = vsel %vm1218, 1, 0
        %v1235 = vsel %vm1219, 1, 0
        %v1236 = vsel %vm1220, 1, 0
        %v1237 = vsel %vm1221, 1, 0
        %v1238 = vsel %vm1222, 1, 0
        %v1239 = vsel %vm1223, 1, 0
        %v1240 = vsel %vm1224, 1, 0
        %v1241 = vcvt.s32.f32 %v1225
        %v1242 = vcvt.s32.f32 %v1226
        %v1243 = vcvt.s32.f32 %v1227
        %v1244 = vcvt.s32.f32 %v1228
        %v1245 = vcvt.s32.f32 %v1229
        %v1246 = vcvt.s32.f32 %v1230
        %v1247 = vcvt.s32.f32 %v1231
        %v1248 = vcvt.s32.f32 %v1232
        %v1249 = vcvt.s32.f32 %v1233
        %v1250 = vcvt.s32.f32 %v1234
        %v1251 = vcvt.s32.f32 %v1235
        %v1252 = vcvt.s32.f32 %v1236
        %v1253 = vcvt.s32.f32 %v1237
        %v1254 = vcvt.s32.f32 %v1238
        %v1255 = vcvt.s32.f32 %v1239
        %v1256 = vcvt.s32.f32 %v1240
        %v1257 = vpack.c.bf16 %v1242, %v1241
        %v1258 = vpack.c.bf16 %v1244, %v1243
        %v1259 = vpack.c.bf16 %v1246, %v1245
        %v1260 = vpack.c.bf16 %v1248, %v1247
        %v1261 = vpack.c.bf16 %v1250, %v1249
        %v1262 = vpack.c.bf16 %v1252, %v1251
        %v1263 = vpack.c.bf16 %v1254, %v1253
        %v1264 = vpack.c.bf16 %v1256, %v1255
        %1265 = vmatprep.subr.bf16.mxu0 %v1093
        %1266 = vmatpush1.bf16.msra.mxu0 %v929
        %1267 = vmatprep.subr.bf16.mxu0 %v1094
        %1268 = vmatpush1.bf16.msra.mxu0 %v930
        %1269 = vmatprep.subr.bf16.mxu0 %v1095
        %1270 = vmatpush1.bf16.msra.mxu0 %v931
        %1271 = vmatprep.subr.bf16.mxu0 %v1096
        %1272 = vmatpush1.bf16.msra.mxu0 %v932
        %1273 = vmatprep.subr.bf16.mxu0 %v1097
        %1274 = vmatpush1.bf16.msra.mxu0 %v933
        %1275 = vmatprep.subr.bf16.mxu0 %v1098
        %1276 = vmatpush1.bf16.msra.mxu0 %v934
        %1277 = vmatprep.subr.bf16.mxu0 %v1099
        %1278 = vmatpush1.bf16.msra.mxu0 %v935
        %1279 = vmatprep.subr.bf16.mxu0 %v1100
        %1280 = vmatpush1.bf16.msra.mxu0 %v936
        %1281 = vmatprep.subr.bf16.mxu0 0
        %1282 = vmatpush1.bf16.msra.mxu0 0
        %1283 = vmatprep.subr.bf16.mxu0 0
        %1284 = vmatpush1.bf16.msra.mxu0 0
        %1285 = vmatprep.subr.bf16.mxu0 0
        %1286 = vmatpush1.bf16.msra.mxu0 0
        %1287 = vmatprep.subr.bf16.mxu0 0
        %1288 = vmatpush1.bf16.msra.mxu0 0
        %1289 = vmatprep.subr.bf16.mxu0 0
        %1290 = vmatpush1.bf16.msra.mxu0 0
        %1291 = vmatprep.subr.bf16.mxu0 0
        %1292 = vmatpush1.bf16.msra.mxu0 0
        %1293 = vmatprep.subr.bf16.mxu0 0
        %1294 = vmatpush1.bf16.msra.mxu0 0
        %1295 = vmatprep.subr.bf16.mxu0 0
        %1296 = vmatpush1.bf16.msra.mxu0 0
        %1297 = vmatprep.mubr.bf16.mxu0 0
        %1298 = vmatmul.mubr.bf16.gmra.mrb[0].mxu0 %v474
        %v1299 = vpop.f32.mrb[0].mxu0
        %v1300 = vadd.f32 0.0, %v1299
        %v1301 = vpop.f32.mrb[0].mxu0
        %v1302 = vadd.f32 0.0, %v1301
        %v1303 = vpop.f32.mrb[0].mxu0
        %v1304 = vadd.f32 0.0, %v1303
        %v1305 = vpop.f32.mrb[0].mxu0
        %v1306 = vadd.f32 0.0, %v1305
        %1307 = vmatprep.mubr.bf16.mxu0 0
        %1308 = vmatmul.mubr.bf16.gmra.mrb[0].mxu0 %v475
        %v1309 = vpop.f32.mrb[0].mxu0
        %v1310 = vadd.f32 0.0, %v1309
        %v1311 = vpop.f32.mrb[0].mxu0
        %v1312 = vadd.f32 0.0, %v1311
        %v1313 = vpop.f32.mrb[0].mxu0
        %v1314 = vadd.f32 0.0, %v1313
        %v1315 = vpop.f32.mrb[0].mxu0
        %v1316 = vadd.f32 0.0, %v1315
        %1317 = vdwg.mxu0
        %1318 = vmatprep.subr.bf16.mxu0 0
        %1319 = vmatpush1.bf16.msra.mxu0 %v1257
        %1320 = vmatprep.subr.bf16.mxu0 0
        %1321 = vmatpush1.bf16.msra.mxu0 %v1258
        %1322 = vmatprep.subr.bf16.mxu0 0
        %1323 = vmatpush1.bf16.msra.mxu0 %v1259
        %1324 = vmatprep.subr.bf16.mxu0 0
        %1325 = vmatpush1.bf16.msra.mxu0 %v1260
        %1326 = vmatprep.subr.bf16.mxu0 0
        %1327 = vmatpush1.bf16.msra.mxu0 %v1261
        %1328 = vmatprep.subr.bf16.mxu0 0
        %1329 = vmatpush1.bf16.msra.mxu0 %v1262
        %1330 = vmatprep.subr.bf16.mxu0 0
        %1331 = vmatpush1.bf16.msra.mxu0 %v1263
        %1332 = vmatprep.subr.bf16.mxu0 0
        %1333 = vmatpush1.bf16.msra.mxu0 %v1264
        %1334 = vmatprep.subr.bf16.mxu0 0
        %1335 = vmatpush1.bf16.msra.mxu0 0
        %1336 = vmatprep.subr.bf16.mxu0 0
        %1337 = vmatpush1.bf16.msra.mxu0 0
        %1338 = vmatprep.subr.bf16.mxu0 0
        %1339 = vmatpush1.bf16.msra.mxu0 0
        %1340 = vmatprep.subr.bf16.mxu0 0
        %1341 = vmatpush1.bf16.msra.mxu0 0
        %1342 = vmatprep.subr.bf16.mxu0 0
        %1343 = vmatpush1.bf16.msra.mxu0 0
        %1344 = vmatprep.subr.bf16.mxu0 0
        %1345 = vmatpush1.bf16.msra.mxu0 0
        %1346 = vmatprep.subr.bf16.mxu0 0
        %1347 = vmatpush1.bf16.msra.mxu0 0
        %1348 = vmatprep.subr.bf16.mxu0 0
        %1349 = vmatpush1.bf16.msra.mxu0 0
        %1350 = vmatprep.mubr.bf16.mxu0 0
        %1351 = vmatmul.mubr.bf16.gmra.mrb[0].mxu0 %v474
        %v1352 = vpop.f32.mrb[0].mxu0
        %v1353 = vadd.f32 0.0, %v1352
        %v1354 = vpop.f32.mrb[0].mxu0
        %v1355 = vpop.f32.mrb[0].mxu0
        %v1356 = vadd.f32 0.0, %v1355
        %v1357 = vpop.f32.mrb[0].mxu0
        %1358 = vmatprep.mubr.bf16.mxu0 0
        %1359 = vmatmul.mubr.bf16.gmra.mrb[0].mxu0 %v475
        %v1360 = vpop.f32.mrb[0].mxu0
        %v1361 = vadd.f32 0.0, %v1360
        %v1362 = vpop.f32.mrb[0].mxu0
        %v1363 = vpop.f32.mrb[0].mxu0
        %v1364 = vadd.f32 0.0, %v1363
        %v1365 = vpop.f32.mrb[0].mxu0
        %1366 = vdwg.mxu0
        %v1367 = vpack.c.bf16 %v1304, %v1300
        %v1368 = vpack.c.bf16 %v1306, %v1302
        %v1369 = vpack.c.bf16 %v1356, %v1353
        %v1370 = vpack.c.bf16 %v1314, %v1310
        %v1371 = vpack.c.bf16 %v1316, %v1312
        %v1372 = vpack.c.bf16 %v1364, %v1361
        %1374 = vset.pattern.permute.xlu0 0
        %1375 = vperm.xlu0 %1374, %v446
        %v1376 = vpop.permute.xlu0 %1375
        %1379 = vset.pattern.permute.xlu0 0
        %1380 = vperm.xlu0 %1379, %v447
        %v1381 = vpop.permute.xlu0 %1380
        %1384 = vset.pattern.permute.xlu0 0
        %1385 = vperm.xlu0 %1384, %v448
        %v1386 = vpop.permute.xlu0 %1385
        %1389 = vset.pattern.permute.xlu0 0
        %1390 = vperm.xlu0 %1389, %v449
        %v1391 = vpop.permute.xlu0 %1390
        %v1397 = vunpack.c.l.b16 %v442
        %v1398 = vunpack.c.l.b16 %v443
        %v1399 = vunpack.c.l.b16 %v444
        %v1400 = vunpack.c.l.b16 %v445
        %v1401 = vpack.c.b16 %v1398, %v1397
        %v1402 = vpack.c.b16 %v1400, %v1399
        %vm1403 = vcmask 523264
        %v1405 = vsel %vm1403, %v1401, 0
        %v1408 = vsel %vm1403, %v1402, 0
        %1410 = vmatprep.subr.bf16.mxu0 %v1368
        %1411 = vmatpush1.bf16.msra.mxu0 %v1367
        %1412 = vmatprep.subr.bf16.mxu0 %v1371
        %1413 = vmatpush1.bf16.msra.mxu0 %v1370
        %1414 = vmatprep.subr.bf16.mxu0 %v476
        %1415 = vmatpush1.bf16.msra.mxu0 %v476
        %1416 = vmatprep.subr.bf16.mxu0 %v477
        %1417 = vmatpush1.bf16.msra.mxu0 %v477
        %1418 = vmatprep.subr.bf16.mxu0 0
        %1419 = vmatpush1.bf16.msra.mxu0 0
        %1420 = vmatprep.subr.bf16.mxu0 0
        %1421 = vmatpush1.bf16.msra.mxu0 0
        %1422 = vmatprep.subr.bf16.mxu0 0
        %1423 = vmatpush1.bf16.msra.mxu0 0
        %1424 = vmatprep.subr.bf16.mxu0 0
        %1425 = vmatpush1.bf16.msra.mxu0 0
        %1426 = vmatprep.subr.bf16.mxu0 0
        %1427 = vmatpush1.bf16.msra.mxu0 0
        %1428 = vmatprep.subr.bf16.mxu0 0
        %1429 = vmatpush1.bf16.msra.mxu0 0
        %1430 = vmatprep.subr.bf16.mxu0 0
        %1431 = vmatpush1.bf16.msra.mxu0 0
        %1432 = vmatprep.subr.bf16.mxu0 0
        %1433 = vmatpush1.bf16.msra.mxu0 0
        %1434 = vmatprep.subr.bf16.mxu0 0
        %1435 = vmatpush1.bf16.msra.mxu0 0
        %1436 = vmatprep.subr.bf16.mxu0 0
        %1437 = vmatpush1.bf16.msra.mxu0 0
        %1438 = vmatprep.subr.bf16.mxu0 0
        %1439 = vmatpush1.bf16.msra.mxu0 0
        %1440 = vmatprep.subr.bf16.mxu0 0
        %1441 = vmatpush1.bf16.msra.mxu0 0
        %1442 = vmatprep.mubr.bf16.mxu0 0
        %1443 = vmatmul.mubr.bf16.gmra.mrb[0].mxu0 %v1405
        %v1444 = vpop.f32.mrb[0].mxu0
        %v1445 = vadd.f32 %v1376, %v1444
        %v1446 = vpop.f32.mrb[0].mxu0
        %v1447 = vadd.f32 %v1376, %v1446
        %v1448 = vpop.f32.mrb[0].mxu0
        %v1449 = vadd.f32 %v1381, %v1448
        %v1450 = vpop.f32.mrb[0].mxu0
        %v1451 = vadd.f32 %v1381, %v1450
        %1452 = vmatprep.mubr.bf16.mxu0 0
        %1453 = vmatmul.mubr.bf16.gmra.mrb[0].mxu0 %v1408
        %v1454 = vpop.f32.mrb[0].mxu0
        %v1455 = vadd.f32 %v1386, %v1454
        %v1456 = vpop.f32.mrb[0].mxu0
        %v1457 = vadd.f32 %v1386, %v1456
        %v1458 = vpop.f32.mrb[0].mxu0
        %v1459 = vadd.f32 %v1391, %v1458
        %v1460 = vpop.f32.mrb[0].mxu0
        %v1461 = vadd.f32 %v1391, %v1460
        %1462 = vdwg.mxu0
        %1463 = vmatprep.subr.bf16.mxu0 0
        %1464 = vmatpush1.bf16.msra.mxu0 %v1369
        %1465 = vmatprep.subr.bf16.mxu0 0
        %1466 = vmatpush1.bf16.msra.mxu0 %v1372
        %1467 = vmatprep.subr.bf16.mxu0 0
        %1468 = vmatpush1.bf16.msra.mxu0 %v476
        %1469 = vmatprep.subr.bf16.mxu0 0
        %1470 = vmatpush1.bf16.msra.mxu0 %v477
        %1471 = vmatprep.subr.bf16.mxu0 0
        %1472 = vmatpush1.bf16.msra.mxu0 0
        %1473 = vmatprep.subr.bf16.mxu0 0
        %1474 = vmatpush1.bf16.msra.mxu0 0
        %1475 = vmatprep.subr.bf16.mxu0 0
        %1476 = vmatpush1.bf16.msra.mxu0 0
        %1477 = vmatprep.subr.bf16.mxu0 0
        %1478 = vmatpush1.bf16.msra.mxu0 0
        %1479 = vmatprep.subr.bf16.mxu0 0
        %1480 = vmatpush1.bf16.msra.mxu0 0
        %1481 = vmatprep.subr.bf16.mxu0 0
        %1482 = vmatpush1.bf16.msra.mxu0 0
        %1483 = vmatprep.subr.bf16.mxu0 0
        %1484 = vmatpush1.bf16.msra.mxu0 0
        %1485 = vmatprep.subr.bf16.mxu0 0
        %1486 = vmatpush1.bf16.msra.mxu0 0
        %1487 = vmatprep.subr.bf16.mxu0 0
        %1488 = vmatpush1.bf16.msra.mxu0 0
        %1489 = vmatprep.subr.bf16.mxu0 0
        %1490 = vmatpush1.bf16.msra.mxu0 0
        %1491 = vmatprep.subr.bf16.mxu0 0
        %1492 = vmatpush1.bf16.msra.mxu0 0
        %1493 = vmatprep.subr.bf16.mxu0 0
        %1494 = vmatpush1.bf16.msra.mxu0 0
        %1495 = vmatprep.mubr.bf16.mxu0 0
        %1496 = vmatmul.mubr.bf16.gmra.mrb[0].mxu0 %v1405
        %v1497 = vpop.f32.mrb[0].mxu0
        %v1498 = vadd.f32 %v1376, %v1497
        %v1499 = vpop.f32.mrb[0].mxu0
        %v1500 = vpop.f32.mrb[0].mxu0
        %v1501 = vadd.f32 %v1381, %v1500
        %v1502 = vpop.f32.mrb[0].mxu0
        %1503 = vmatprep.mubr.bf16.mxu0 0
        %1504 = vmatmul.mubr.bf16.gmra.mrb[0].mxu0 %v1408
        %v1505 = vpop.f32.mrb[0].mxu0
        %v1506 = vadd.f32 %v1386, %v1505
        %v1507 = vpop.f32.mrb[0].mxu0
        %v1508 = vpop.f32.mrb[0].mxu0
        %v1509 = vadd.f32 %v1391, %v1508
        %v1510 = vpop.f32.mrb[0].mxu0
        %1511 = vdwg.mxu0
        %v1512 = vmax.f32 %v1445, 0.0
        %v1513 = vmax.f32 %v1447, 0.0
        %v1514 = vmax.f32 %v1498, 0.0
        %v1515 = vmax.f32 %v1449, 0.0
        %v1516 = vmax.f32 %v1451, 0.0
        %v1517 = vmax.f32 %v1501, 0.0
        %v1518 = vmax.f32 %v1455, 0.0
        %v1519 = vmax.f32 %v1457, 0.0
        %v1520 = vmax.f32 %v1506, 0.0
        %v1521 = vmax.f32 %v1459, 0.0
        %v1522 = vmax.f32 %v1461, 0.0
        %v1523 = vmax.f32 %v1509, 0.0
        %v1524 = vpack.c.bf16 %v1515, %v1512
        %v1525 = vpack.c.bf16 %v1516, %v1513
        %v1526 = vpack.c.bf16 %v1517, %v1514
        %v1527 = vpack.c.bf16 %v1521, %v1518
        %v1528 = vpack.c.bf16 %v1522, %v1519
        %v1529 = vpack.c.bf16 %v1523, %v1520
        %1531 = vset.pattern.permute.xlu0 0
        %1532 = vperm.xlu0 %1531, %v454
        %v1533 = vpop.permute.xlu0 %1532
        %1536 = vset.pattern.permute.xlu0 0
        %1537 = vperm.xlu0 %1536, %v455
        %v1538 = vpop.permute.xlu0 %1537
        %1541 = vset.pattern.permute.xlu0 0
        %1542 = vperm.xlu0 %1541, %v456
        %v1543 = vpop.permute.xlu0 %1542
        %1546 = vset.pattern.permute.xlu0 0
        %1547 = vperm.xlu0 %1546, %v457
        %v1548 = vpop.permute.xlu0 %1547
        %v1554 = vunpack.c.l.b16 %v450
        %v1555 = vunpack.c.l.b16 %v451
        %v1556 = vunpack.c.l.b16 %v452
        %v1557 = vunpack.c.l.b16 %v453
        %v1558 = vpack.c.b16 %v1555, %v1554
        %v1559 = vpack.c.b16 %v1557, %v1556
        %v1561 = vsel %vm530, %v1558, 0
        %v1564 = vsel %vm530, %v1559, 0
        %1566 = vmatprep.subr.bf16.mxu0 %v1525
        %1567 = vmatpush1.bf16.msra.mxu0 %v1524
        %1568 = vmatprep.subr.bf16.mxu0 %v1528
        %1569 = vmatpush1.bf16.msra.mxu0 %v1527
        %1570 = vmatprep.subr.bf16.mxu0 0
        %1571 = vmatpush1.bf16.msra.mxu0 0
        %1572 = vmatprep.subr.bf16.mxu0 0
        %1573 = vmatpush1.bf16.msra.mxu0 0
        %1574 = vmatprep.subr.bf16.mxu0 0
        %1575 = vmatpush1.bf16.msra.mxu0 0
        %1576 = vmatprep.subr.bf16.mxu0 0
        %1577 = vmatpush1.bf16.msra.mxu0 0
        %1578 = vmatprep.subr.bf16.mxu0 0
        %1579 = vmatpush1.bf16.msra.mxu0 0
        %1580 = vmatprep.subr.bf16.mxu0 0
        %1581 = vmatpush1.bf16.msra.mxu0 0
        %1582 = vmatprep.subr.bf16.mxu0 0
        %1583 = vmatpush1.bf16.msra.mxu0 0
        %1584 = vmatprep.subr.bf16.mxu0 0
        %1585 = vmatpush1.bf16.msra.mxu0 0
        %1586 = vmatprep.subr.bf16.mxu0 0
        %1587 = vmatpush1.bf16.msra.mxu0 0
        %1588 = vmatprep.subr.bf16.mxu0 0
        %1589 = vmatpush1.bf16.msra.mxu0 0
        %1590 = vmatprep.subr.bf16.mxu0 0
        %1591 = vmatpush1.bf16.msra.mxu0 0
        %1592 = vmatprep.subr.bf16.mxu0 0
        %1593 = vmatpush1.bf16.msra.mxu0 0
        %1594 = vmatprep.subr.bf16.mxu0 0
        %1595 = vmatpush1.bf16.msra.mxu0 0
        %1596 = vmatprep.subr.bf16.mxu0 0
        %1597 = vmatpush1.bf16.msra.mxu0 0
        %1598 = vmatprep.mubr.bf16.mxu0 0
        %1599 = vmatmul.mubr.bf16.gmra.mrb[0].mxu0 %v1561
        %v1600 = vpop.f32.mrb[0].mxu0
        %v1601 = vadd.f32 %v1533, %v1600
        %v1602 = vpop.f32.mrb[0].mxu0
        %v1603 = vadd.f32 %v1533, %v1602
        %v1604 = vpop.f32.mrb[0].mxu0
        %v1605 = vadd.f32 %v1538, %v1604
        %v1606 = vpop.f32.mrb[0].mxu0
        %v1607 = vadd.f32 %v1538, %v1606
        %1608 = vmatprep.mubr.bf16.mxu0 0
        %1609 = vmatmul.mubr.bf16.gmra.mrb[0].mxu0 %v1564
        %v1610 = vpop.f32.mrb[0].mxu0
        %v1611 = vadd.f32 %v1543, %v1610
        %v1612 = vpop.f32.mrb[0].mxu0
        %v1613 = vadd.f32 %v1543, %v1612
        %v1614 = vpop.f32.mrb[0].mxu0
        %v1615 = vadd.f32 %v1548, %v1614
        %v1616 = vpop.f32.mrb[0].mxu0
        %v1617 = vadd.f32 %v1548, %v1616
        %1618 = vdwg.mxu0
        %1619 = vmatprep.subr.bf16.mxu0 0
        %1620 = vmatpush1.bf16.msra.mxu0 %v1526
        %1621 = vmatprep.subr.bf16.mxu0 0
        %1622 = vmatpush1.bf16.msra.mxu0 %v1529
        %1623 = vmatprep.subr.bf16.mxu0 0
        %1624 = vmatpush1.bf16.msra.mxu0 0
        %1625 = vmatprep.subr.bf16.mxu0 0
        %1626 = vmatpush1.bf16.msra.mxu0 0
        %1627 = vmatprep.subr.bf16.mxu0 0
        %1628 = vmatpush1.bf16.msra.mxu0 0
        %1629 = vmatprep.subr.bf16.mxu0 0
        %1630 = vmatpush1.bf16.msra.mxu0 0
        %1631 = vmatprep.subr.bf16.mxu0 0
        %1632 = vmatpush1.bf16.msra.mxu0 0
        %1633 = vmatprep.subr.bf16.mxu0 0
        %1634 = vmatpush1.bf16.msra.mxu0 0
        %1635 = vmatprep.subr.bf16.mxu0 0
        %1636 = vmatpush1.bf16.msra.mxu0 0
        %1637 = vmatprep.subr.bf16.mxu0 0
        %1638 = vmatpush1.bf16.msra.mxu0 0
        %1639 = vmatprep.subr.bf16.mxu0 0
        %1640 = vmatpush1.bf16.msra.mxu0 0
        %1641 = vmatprep.subr.bf16.mxu0 0
        %1642 = vmatpush1.bf16.msra.mxu0 0
        %1643 = vmatprep.subr.bf16.mxu0 0
        %1644 = vmatpush1.bf16.msra.mxu0 0
        %1645 = vmatprep.subr.bf16.mxu0 0
        %1646 = vmatpush1.bf16.msra.mxu0 0
        %1647 = vmatprep.subr.bf16.mxu0 0
        %1648 = vmatpush1.bf16.msra.mxu0 0
        %1649 = vmatprep.subr.bf16.mxu0 0
        %1650 = vmatpush1.bf16.msra.mxu0 0
        %1651 = vmatprep.mubr.bf16.mxu0 0
        %1652 = vmatmul.mubr.bf16.gmra.mrb[0].mxu0 %v1561
        %v1653 = vpop.f32.mrb[0].mxu0
        %v1654 = vadd.f32 %v1533, %v1653
        %v1655 = vpop.f32.mrb[0].mxu0
        %v1656 = vpop.f32.mrb[0].mxu0
        %v1657 = vadd.f32 %v1538, %v1656
        %v1658 = vpop.f32.mrb[0].mxu0
        %1659 = vmatprep.mubr.bf16.mxu0 0
        %1660 = vmatmul.mubr.bf16.gmra.mrb[0].mxu0 %v1564
        %v1661 = vpop.f32.mrb[0].mxu0
        %v1662 = vadd.f32 %v1543, %v1661
        %v1663 = vpop.f32.mrb[0].mxu0
        %v1664 = vpop.f32.mrb[0].mxu0
        %v1665 = vadd.f32 %v1548, %v1664
        %v1666 = vpop.f32.mrb[0].mxu0
        %1667 = vdwg.mxu0
        %v1668 = vmax.f32 %v1601, 0.0
        %v1669 = vmax.f32 %v1603, 0.0
        %v1670 = vmax.f32 %v1654, 0.0
        %v1671 = vmax.f32 %v1605, 0.0
        %v1672 = vmax.f32 %v1607, 0.0
        %v1673 = vmax.f32 %v1657, 0.0
        %v1674 = vmax.f32 %v1611, 0.0
        %v1675 = vmax.f32 %v1613, 0.0
        %v1676 = vmax.f32 %v1662, 0.0
        %v1677 = vmax.f32 %v1615, 0.0
        %v1678 = vmax.f32 %v1617, 0.0
        %v1679 = vmax.f32 %v1665, 0.0
        %v1680 = vpack.c.bf16 %v1671, %v1668
        %v1681 = vpack.c.bf16 %v1672, %v1669
        %v1682 = vpack.c.bf16 %v1673, %v1670
        %v1683 = vpack.c.bf16 %v1677, %v1674
        %v1684 = vpack.c.bf16 %v1678, %v1675
        %v1685 = vpack.c.bf16 %v1679, %v1676
        %1687 = vset.pattern.permute.xlu0 0
        %1688 = vperm.xlu0 %1687, %v462
        %v1689 = vpop.permute.xlu0 %1688
        %1692 = vset.pattern.permute.xlu0 0
        %1693 = vperm.xlu0 %1692, %v463
        %v1694 = vpop.permute.xlu0 %1693
        %1697 = vset.pattern.permute.xlu0 0
        %1698 = vperm.xlu0 %1697, %v464
        %v1699 = vpop.permute.xlu0 %1698
        %1702 = vset.pattern.permute.xlu0 0
        %1703 = vperm.xlu0 %1702, %v465
        %v1704 = vpop.permute.xlu0 %1703
        %v1710 = vunpack.c.l.b16 %v458
        %v1711 = vunpack.c.l.b16 %v459
        %v1712 = vunpack.c.l.b16 %v460
        %v1713 = vunpack.c.l.b16 %v461
        %v1714 = vpack.c.b16 %v1711, %v1710
        %v1715 = vpack.c.b16 %v1713, %v1712
        %v1717 = vsel %vm530, %v1714, 0
        %v1720 = vsel %vm530, %v1715, 0
        %1722 = vmatprep.subr.bf16.mxu0 %v1681
        %1723 = vmatpush1.bf16.msra.mxu0 %v1680
        %1724 = vmatprep.subr.bf16.mxu0 %v1684
        %1725 = vmatpush1.bf16.msra.mxu0 %v1683
        %1726 = vmatprep.subr.bf16.mxu0 0
        %1727 = vmatpush1.bf16.msra.mxu0 0
        %1728 = vmatprep.subr.bf16.mxu0 0
        %1729 = vmatpush1.bf16.msra.mxu0 0
        %1730 = vmatprep.subr.bf16.mxu0 0
        %1731 = vmatpush1.bf16.msra.mxu0 0
        %1732 = vmatprep.subr.bf16.mxu0 0
        %1733 = vmatpush1.bf16.msra.mxu0 0
        %1734 = vmatprep.subr.bf16.mxu0 0
        %1735 = vmatpush1.bf16.msra.mxu0 0
        %1736 = vmatprep.subr.bf16.mxu0 0
        %1737 = vmatpush1.bf16.msra.mxu0 0
        %1738 = vmatprep.subr.bf16.mxu0 0
        %1739 = vmatpush1.bf16.msra.mxu0 0
        %1740 = vmatprep.subr.bf16.mxu0 0
        %1741 = vmatpush1.bf16.msra.mxu0 0
        %1742 = vmatprep.subr.bf16.mxu0 0
        %1743 = vmatpush1.bf16.msra.mxu0 0
        %1744 = vmatprep.subr.bf16.mxu0 0
        %1745 = vmatpush1.bf16.msra.mxu0 0
        %1746 = vmatprep.subr.bf16.mxu0 0
        %1747 = vmatpush1.bf16.msra.mxu0 0
        %1748 = vmatprep.subr.bf16.mxu0 0
        %1749 = vmatpush1.bf16.msra.mxu0 0
        %1750 = vmatprep.subr.bf16.mxu0 0
        %1751 = vmatpush1.bf16.msra.mxu0 0
        %1752 = vmatprep.subr.bf16.mxu0 0
        %1753 = vmatpush1.bf16.msra.mxu0 0
        %1754 = vmatprep.mubr.bf16.mxu0 0
        %1755 = vmatmul.mubr.bf16.gmra.mrb[0].mxu0 %v1717
        %v1756 = vpop.f32.mrb[0].mxu0
        %v1757 = vadd.f32 %v1689, %v1756
        %v1758 = vpop.f32.mrb[0].mxu0
        %v1759 = vadd.f32 %v1689, %v1758
        %v1760 = vpop.f32.mrb[0].mxu0
        %v1761 = vadd.f32 %v1694, %v1760
        %v1762 = vpop.f32.mrb[0].mxu0
        %v1763 = vadd.f32 %v1694, %v1762
        %1764 = vmatprep.mubr.bf16.mxu0 0
        %1765 = vmatmul.mubr.bf16.gmra.mrb[0].mxu0 %v1720
        %v1766 = vpop.f32.mrb[0].mxu0
        %v1767 = vadd.f32 %v1699, %v1766
        %v1768 = vpop.f32.mrb[0].mxu0
        %v1769 = vadd.f32 %v1699, %v1768
        %v1770 = vpop.f32.mrb[0].mxu0
        %v1771 = vadd.f32 %v1704, %v1770
        %v1772 = vpop.f32.mrb[0].mxu0
        %v1773 = vadd.f32 %v1704, %v1772
        %1774 = vdwg.mxu0
        %1775 = vmatprep.subr.bf16.mxu0 0
        %1776 = vmatpush1.bf16.msra.mxu0 %v1682
        %1777 = vmatprep.subr.bf16.mxu0 0
        %1778 = vmatpush1.bf16.msra.mxu0 %v1685
        %1779 = vmatprep.subr.bf16.mxu0 0
        %1780 = vmatpush1.bf16.msra.mxu0 0
        %1781 = vmatprep.subr.bf16.mxu0 0
        %1782 = vmatpush1.bf16.msra.mxu0 0
        %1783 = vmatprep.subr.bf16.mxu0 0
        %1784 = vmatpush1.bf16.msra.mxu0 0
        %1785 = vmatprep.subr.bf16.mxu0 0
        %1786 = vmatpush1.bf16.msra.mxu0 0
        %1787 = vmatprep.subr.bf16.mxu0 0
        %1788 = vmatpush1.bf16.msra.mxu0 0
        %1789 = vmatprep.subr.bf16.mxu0 0
        %1790 = vmatpush1.bf16.msra.mxu0 0
        %1791 = vmatprep.subr.bf16.mxu0 0
        %1792 = vmatpush1.bf16.msra.mxu0 0
        %1793 = vmatprep.subr.bf16.mxu0 0
        %1794 = vmatpush1.bf16.msra.mxu0 0
        %1795 = vmatprep.subr.bf16.mxu0 0
        %1796 = vmatpush1.bf16.msra.mxu0 0
        %1797 = vmatprep.subr.bf16.mxu0 0
        %1798 = vmatpush1.bf16.msra.mxu0 0
        %1799 = vmatprep.subr.bf16.mxu0 0
        %1800 = vmatpush1.bf16.msra.mxu0 0
        %1801 = vmatprep.subr.bf16.mxu0 0
        %1802 = vmatpush1.bf16.msra.mxu0 0
        %1803 = vmatprep.subr.bf16.mxu0 0
        %1804 = vmatpush1.bf16.msra.mxu0 0
        %1805 = vmatprep.subr.bf16.mxu0 0
        %1806 = vmatpush1.bf16.msra.mxu0 0
        %1807 = vmatprep.mubr.bf16.mxu0 0
        %1808 = vmatmul.mubr.bf16.gmra.mrb[0].mxu0 %v1717
        %v1809 = vpop.f32.mrb[0].mxu0
        %v1810 = vadd.f32 %v1689, %v1809
        %v1811 = vpop.f32.mrb[0].mxu0
        %v1812 = vpop.f32.mrb[0].mxu0
        %v1813 = vadd.f32 %v1694, %v1812
        %v1814 = vpop.f32.mrb[0].mxu0
        %1815 = vmatprep.mubr.bf16.mxu0 0
        %1816 = vmatmul.mubr.bf16.gmra.mrb[0].mxu0 %v1720
        %v1817 = vpop.f32.mrb[0].mxu0
        %v1818 = vadd.f32 %v1699, %v1817
        %v1819 = vpop.f32.mrb[0].mxu0
        %v1820 = vpop.f32.mrb[0].mxu0
        %v1821 = vadd.f32 %v1704, %v1820
        %v1822 = vpop.f32.mrb[0].mxu0
        %1823 = vdwg.mxu0
        %v1824 = vmax.f32 %v1757, 0.0
        %v1825 = vmax.f32 %v1759, 0.0
        %v1826 = vmax.f32 %v1810, 0.0
        %v1827 = vmax.f32 %v1761, 0.0
        %v1828 = vmax.f32 %v1763, 0.0
        %v1829 = vmax.f32 %v1813, 0.0
        %v1830 = vmax.f32 %v1767, 0.0
        %v1831 = vmax.f32 %v1769, 0.0
        %v1832 = vmax.f32 %v1818, 0.0
        %v1833 = vmax.f32 %v1771, 0.0
        %v1834 = vmax.f32 %v1773, 0.0
        %v1835 = vmax.f32 %v1821, 0.0
        %v1836 = vmax.f32 %v1824, %v1825
        %v1837 = vmax.f32 %v1827, %v1828
        %v1838 = vmax.f32 %v1830, %v1831
        %v1839 = vmax.f32 %v1833, %v1834
        %v1840 = vmax.f32 %v1836, %v1826
        %v1841 = vmax.f32 %v1837, %v1829
        %v1842 = vmax.f32 %v1838, %v1832
        %v1843 = vmax.f32 %v1839, %v1835
        %v1844 = vadd.f32 %v438, %v1840
        %v1845 = vadd.f32 %v439, %v1841
        %v1846 = vadd.f32 %v440, %v1842
        %v1847 = vadd.f32 %v441, %v1843
        %v1848 = vpack.c.bf16 %v1845, %v1844
        %v1849 = vpack.c.bf16 %v1847, %v1846
        %1851 = vset.pattern.permute.xlu0 0
        %1852 = vperm.xlu0 %1851, %v470
        %v1853 = vpop.permute.xlu0 %1852
        %1856 = vset.pattern.permute.xlu0 0
        %1857 = vperm.xlu0 %1856, %v471
        %v1858 = vpop.permute.xlu0 %1857
        %1861 = vset.pattern.permute.xlu0 0
        %1862 = vperm.xlu0 %1861, %v472
        %v1863 = vpop.permute.xlu0 %1862
        %1866 = vset.pattern.permute.xlu0 0
        %1867 = vperm.xlu0 %1866, %v473
        %v1868 = vpop.permute.xlu0 %1867
        %v1874 = vunpack.c.l.b16 %v466
        %v1875 = vunpack.c.l.b16 %v467
        %v1876 = vunpack.c.l.b16 %v468
        %v1877 = vunpack.c.l.b16 %v469
        %v1878 = vpack.c.b16 %v1875, %v1874
        %v1879 = vpack.c.b16 %v1877, %v1876
        %v1881 = vsel %vm530, %v1878, 0
        %v1884 = vsel %vm530, %v1879, 0
        %1886 = vmatprep.subr.bf16.mxu0 0
        %1887 = vmatpush1.bf16.msra.mxu0 %v1848
        %1888 = vmatprep.subr.bf16.mxu0 0
        %1889 = vmatpush1.bf16.msra.mxu0 %v1849
        %1890 = vmatprep.subr.bf16.mxu0 0
        %1891 = vmatpush1.bf16.msra.mxu0 0
        %1892 = vmatprep.subr.bf16.mxu0 0
        %1893 = vmatpush1.bf16.msra.mxu0 0
        %1894 = vmatprep.subr.bf16.mxu0 0
        %1895 = vmatpush1.bf16.msra.mxu0 0
        %1896 = vmatprep.subr.bf16.mxu0 0
        %1897 = vmatpush1.bf16.msra.mxu0 0
        %1898 = vmatprep.subr.bf16.mxu0 0
        %1899 = vmatpush1.bf16.msra.mxu0 0
        %1900 = vmatprep.subr.bf16.mxu0 0
        %1901 = vmatpush1.bf16.msra.mxu0 0
        %1902 = vmatprep.subr.bf16.mxu0 0
        %1903 = vmatpush1.bf16.msra.mxu0 0
        %1904 = vmatprep.subr.bf16.mxu0 0
        %1905 = vmatpush1.bf16.msra.mxu0 0
        %1906 = vmatprep.subr.bf16.mxu0 0
        %1907 = vmatpush1.bf16.msra.mxu0 0
        %1908 = vmatprep.subr.bf16.mxu0 0
        %1909 = vmatpush1.bf16.msra.mxu0 0
        %1910 = vmatprep.subr.bf16.mxu0 0
        %1911 = vmatpush1.bf16.msra.mxu0 0
        %1912 = vmatprep.subr.bf16.mxu0 0
        %1913 = vmatpush1.bf16.msra.mxu0 0
        %1914 = vmatprep.subr.bf16.mxu0 0
        %1915 = vmatpush1.bf16.msra.mxu0 0
        %1916 = vmatprep.subr.bf16.mxu0 0
        %1917 = vmatpush1.bf16.msra.mxu0 0
        %1918 = vmatprep.mubr.bf16.mxu0 0
        %1919 = vmatmul.mubr.bf16.gmra.mrb[0].mxu0 %v1881
        %v1920 = vpop.f32.mrb[0].mxu0
        %v1921 = vadd.f32 %v1853, %v1920
        %v1922 = vpop.f32.mrb[0].mxu0
        %v1923 = vpop.f32.mrb[0].mxu0
        %v1924 = vadd.f32 %v1858, %v1923
        %v1925 = vpop.f32.mrb[0].mxu0
        %1926 = vmatprep.mubr.bf16.mxu0 0
        %1927 = vmatmul.mubr.bf16.gmra.mrb[0].mxu0 %v1884
        %v1928 = vpop.f32.mrb[0].mxu0
        %v1929 = vadd.f32 %v1863, %v1928
        %v1930 = vpop.f32.mrb[0].mxu0
        %v1931 = vpop.f32.mrb[0].mxu0
        %v1932 = vadd.f32 %v1868, %v1931
        %v1933 = vpop.f32.mrb[0].mxu0
        %1934 = vdwg.mxu0
        %v1935 = vmax.f32 %v1921, 0.0
        %v1936 = vmax.f32 %v1924, 0.0
        %v1937 = vmax.f32 %v1929, 0.0
        %v1938 = vmax.f32 %v1932, 0.0
        %1939 = vst [vmem:[%s419] sm:$0xff] %v1935
        %1940 = vst [vmem:[%s419 + $0x8] sm:$0xff] %v1936
        %1941 = vst [vmem:[%s419 + $0x10] sm:$0xff] %v1937
        %1942 = vst [vmem:[%s419 + $0x18] sm:$0xff] %v1938
        %s1943 = sand.u32 %s270, 1
        %s1944 = scalar_lea.sflag [#allocation4], %s1943
        %s1945 = sand.u32 %s270, 1
        %s1946 = smul.addr %s1945, 32
        %s1947 = scalar_lea.vmem [#allocation7], %s1946
        // Predicated region
        $region69: #{tpu_custom_call.1} parent=59 // pred_check
          %p1948 = pneg %p280
        $region70: #{tpu_custom_call.1} parent=59 // pred_check_branch
          %1950 = sbr.rel (%p1948) target = $region72
        $region71: #{tpu_custom_call.1} parent=59 // pred_region
          %s1952 = ssub.s32 512, 512
          %1953 = vsyncadd %s1944, %s1952
          %s1954 = smul.addr %s30, 4
          %s1955 = sadd.s32 %s31, %s1954
          %s1956 = smul.addr %s1955, 128
          %s1957 = scalar_lea.hbm %s10, %s1956
          %s1958 = sshll.u32 %s1947, 4
          %s1959 = int_to_ptr.vmem [resolvable:$true] %s1958
          %1964 = dma.vmem_to_hbm [thread:$0]  %s1959, 512, %s1957, %s1944, 128, 128, 8
        $region72: #{tpu_custom_call.1} parent=59 // pred_fallthru
          _
      $region60: #{tpu_custom_call.1} parent=5 // pred_fallthru
        _
      %p1965 = scmp.le.s32.totalorder 2, %s21
      // Predicated region
      $region73: #{tpu_custom_call.1} parent=5 // pred_check
        %p1966 = pneg %p1965
      $region74: #{tpu_custom_call.1} parent=5 // pred_check_branch
        %1968 = sbr.rel (%p1966) target = $region76
      $region75: #{tpu_custom_call.1} parent=5 // pred_region
        %s1969 = ssub.s32 %s21, 2
        // Predicated region
        $region77: #{tpu_custom_call.1} parent=75 // pred_check
          %p1970 = pneg %p286
        $region78: #{tpu_custom_call.1} parent=75 // pred_check_branch
          %1972 = sbr.rel (%p1970) target = $region80
        $region79: #{tpu_custom_call.1} parent=75 // pred_region
          %s1973 = sand.u32 %s271, 1
          %s1974 = scalar_lea.sflag [#allocation4], %s1973
          %s1975 = sand.u32 %s271, 1
          %s1976 = smul.addr %s1975, 32
          %s1977 = scalar_lea.vmem [#allocation7], %s1976
          %1978 = dma.done %s1974, 512
        $region80: #{tpu_custom_call.1} parent=75 // pred_fallthru
          _
      $region76: #{tpu_custom_call.1} parent=5 // pred_fallthru
        _
    $region6: #{tpu_custom_call.1} parent=1 // loop_footer
      %s25 = sadd.s32 1, %s21
    $region7: #{tpu_custom_call.1} parent=1 // loop_footer_branch
      %20 = sbr.rel target = $region3
    $region8: #{tpu_custom_call.1} parent=1 // loop_exit
      _
    %1979 = vsyncpa [#allocation3], 1
    %s1980 = scalar_lea.sflag [#allocation3], 1
    %1981 = vsyncpa %s1980, 1
    %1982 = vsyncpa [#allocation6], 1
    %1983 = vsyncpa [#allocation4], 1
    %s1984 = scalar_lea.sflag [#allocation4], 1
    %1985 = vsyncpa %s1984, 1

</llo_original>
